<compile_context>
chip_gen: v6e
topology: v6e:2x2x1
jax: 0.10.0
libtpu: 0.0.40
codegen_flags: <defaults>
</compile_context>

<pallas_src>
import jax
import jax.numpy as jnp
from jax.experimental import pallas as pl
from jax.experimental.pallas import tpu as pltpu  # noqa: F401  (kept for TPU-specific tuning hooks)


# ---------------------------------------------------------------------------
# Fused QED kernel builder (static shapes / slab offsets captured in closure)
# ---------------------------------------------------------------------------
def build_qed(n, f_in, hidden, latent, h1, h2, k):
    assert n > 0 and (n & (n - 1)) == 0, "N must be a power of two (in-kernel replication mask)"
    width = max(hidden, 2 * latent, h1, h2)
    kn = k * n
    L = latent

    # --- static slab row layout (each entry 8-row aligned for clean sublane slices) ---
    offs = {}
    r = 0

    def alloc(name, nrows):
        nonlocal r
        offs[name] = r
        r += ((nrows + 7) // 8) * 8

    alloc("w1", f_in)        # [f_in, hidden]
    alloc("w2", hidden)      # [hidden, hidden]
    alloc("wml", hidden)     # [hidden, 2*latent]   (mu | log_var projection, merged)
    alloc("waw1", f_in)      # [f_in, 2]   = w1 @ aw1   (folded attention scores)
    alloc("waw2", hidden)    # [hidden, 2] = w2 @ aw2
    alloc("wawml", hidden)   # [hidden, 4] = [wmu@awmu | wlv@awlv]
    alloc("b1", 1)           # [1, hidden]
    alloc("b2", 1)           # [1, hidden]
    alloc("bml", 1)          # [1, 2*latent]
    alloc("mw1T", h1)        # [h1, latent]   (MLP layer 1, pre-transposed)
    alloc("mw2T", h2)        # [h2, h1]
    alloc("mw3", h2)         # [h2, 1]        (MLP layer 3 as a column, 1/K folded in)
    alloc("mb1T", h1)        # [h1, 1]
    alloc("mb2T", h2)        # [h2, 1]
    alloc("mb3", 1)          # [1, 1]
    total_rows = max(r, 8)

    def pack_params(enc, mlp):
        """Host-side packing. Call ONCE, outside the per-call forward path."""
        s = jnp.zeros((total_rows, width), jnp.float32)

        def put(name, arr):
            nonlocal s
            arr = jnp.asarray(arr, jnp.float32)
            rr, cc = arr.shape
            s = s.at[offs[name]:offs[name] + rr, :cc].set(arr)

        put("w1", enc["w1"])
        put("w2", enc["w2"])
        put("wml", jnp.concatenate([enc["wmu"], enc["wlv"]], axis=1))
        put("waw1", enc["w1"] @ enc["aw1"])
        put("waw2", enc["w2"] @ enc["aw2"])
        put("wawml", jnp.concatenate([enc["wmu"] @ enc["awmu"],
                                      enc["wlv"] @ enc["awlv"]], axis=1))
        put("b1", enc["b1"])
        put("b2", enc["b2"])
        put("bml", jnp.concatenate([enc["bmu"], enc["blv"]], axis=1))
        put("mw1T", mlp["w1"].T)
        put("mw2T", mlp["w2"].T)
        put("mw3", mlp["w3"] / float(k))     # mean over K samples folded into the last layer
        put("mb1T", mlp["b1"].T)
        put("mb2T", mlp["b2"].T)
        put("mb3", mlp["b3"])
        return s

    def kernel(x_ref, adj_ref, epsT_ref, p_ref, out_ref):
        f32 = jnp.float32
        x = x_ref[...]          # [n, f_in]
        adj = adj_ref[...]      # [n, n], adj[dst, src], self-loops included

        def sl(name, nrows, ncols):
            o = offs[name]
            return p_ref[o:o + nrows, :ncols]

        def attn(hw, s_src, s_dst):
            # Masked GAT attention softmax + aggregation (self-loops => denom > 0).
            e = s_dst + s_src.T                            # e[i,j] = s_dst[i] + s_src[j]
            e = jnp.where(e >= 0.0, e, 0.2 * e)            # LeakyReLU(0.2)
            e = jnp.where(adj > 0.5, e, -1e30)             # exclude non-edges from row max
            e = e - jnp.max(e, axis=-1, keepdims=True)
            p = jnp.exp(e) * adj
            d = jnp.sum(p, axis=-1, keepdims=True)
            rr = pl.reciprocal(d, approx=True)             # EUP slot, no VALU divide
            rr = rr * (2.0 - d * rr)                       # one Newton step -> ~f32 accuracy
            return jnp.dot(p * rr, hw, preferred_element_type=f32)

        # --- encoder: conv1 -> relu -> conv2 -> relu (hw and s both depend only on the input) ---
        hw = jnp.dot(x, sl("w1", f_in, hidden), preferred_element_type=f32)     # [n, hidden]
        s = jnp.dot(x, sl("waw1", f_in, 2), preferred_element_type=f32)         # [n, 2]
        h = jnp.maximum(attn(hw, s[:, 0:1], s[:, 1:2]) + sl("b1", 1, hidden), 0.0)

        hw = jnp.dot(h, sl("w2", hidden, hidden), preferred_element_type=f32)
        s = jnp.dot(h, sl("waw2", hidden, 2), preferred_element_type=f32)
        h = jnp.maximum(attn(hw, s[:, 0:1], s[:, 1:2]) + sl("b2", 1, hidden), 0.0)

        # --- merged mu / log_var head ---
        hw = jnp.dot(h, sl("wml", hidden, 2 * L), preferred_element_type=f32)   # [n, 2L]
        s = jnp.dot(h, sl("wawml", hidden, 4), preferred_element_type=f32)      # [n, 4]
        bml = sl("bml", 1, 2 * L)
        mu = attn(hw[:, :L], s[:, 0:1], s[:, 1:2]) + bml[:, :L]
        lv = attn(hw[:, L:], s[:, 2:3], s[:, 3:4]) + bml[:, L:]
        # std = 0.1 + softplus(log_var), numerically stable, computed once
        std = 0.1 + (jnp.maximum(lv, 0.0) + jnp.log1p(jnp.exp(-jnp.abs(lv))))

        # --- K reparameterized samples + MLP, transposed (samples on the lane axis) ---
        # repT[m, k*n + m] = 1 : replication of per-node columns across the K samples.
        row = jax.lax.broadcasted_iota(jnp.int32, (n, kn), 0)
        col = jax.lax.broadcasted_iota(jnp.int32, (n, kn), 1)
        repT = jnp.where((col & (n - 1)) == row, 1.0, 0.0).astype(f32)          # [n, K*n]

        msT = jnp.concatenate([mu, std], axis=1).T                              # [2L, n]
        ms_rep = jnp.dot(msT, repT, preferred_element_type=f32)                 # [2L, K*n]
        zT = ms_rep[:L, :] + ms_rep[L:, :] * epsT_ref[...]                      # [L, K*n]

        a = jnp.maximum(jnp.dot(sl("mw1T", h1, L), zT, preferred_element_type=f32)
                        + sl("mb1T", h1, 1), 0.0)                               # [h1, K*n]
        a = jnp.maximum(jnp.dot(sl("mw2T", h2, h1), a, preferred_element_type=f32)
                        + sl("mb2T", h2, 1), 0.0)                               # [h2, K*n]

        # mean over K folded before the last layer (1/K baked into mw3 at pack time)
        a_sumT = jax.lax.dot_general(repT, a, (((1,), (1,)), ((), ())),
                                     preferred_element_type=f32)                # [n, h2]
        pred = jnp.dot(a_sumT, sl("mw3", h2, 1), preferred_element_type=f32) \
            + sl("mb3", 1, 1)                                                   # [n, 1]

        # --- merged output: [mu | log_var | std | pred] ---
        out_ref[:, 0:L] = mu
        out_ref[:, L:2 * L] = lv
        out_ref[:, 2 * L:3 * L] = std
        out_ref[:, 3 * L:3 * L + 1] = pred

    @jax.jit
    def forward(x, adj, eps, pslab):
        # eps: [K, N, latent] standard-normal draws -> lane-dense [latent, K*N]
        epsT = jnp.transpose(eps, (2, 0, 1)).reshape(latent, kn)
        out = pl.pallas_call(
            kernel,
            out_shape=jax.ShapeDtypeStruct((n, 3 * latent + 1), jnp.float32),
        )(x, adj, epsT, pslab)
        mu = out[:, :latent]
        lv = out[:, latent:2 * latent]
        std = out[:, 2 * latent:3 * latent]
        pred = out[:, 3 * latent:3 * latent + 1]
        return pred, mu, lv, (mu, std)   # (pred, z_mu, z_log_var, q)

    return pack_params, forward


# ---------------------------------------------------------------------------
# Pure-JAX reference (standard math: exact softmax division, per-sample loop)
# ---------------------------------------------------------------------------
def qed_forward_ref(x, adj, eps, enc_params, mlp_params):
    def gat(h, w, aw, b):
        hw = h @ w
        s = hw @ aw                                              # [N, 2]
        e = jax.nn.leaky_relu(s[:, 1:2] + s[:, 0:1].T, 0.2)
        e = jnp.where(adj > 0.5, e, -jnp.inf)
        return jax.nn.softmax(e, axis=-1) @ hw + b

    p = enc_params
    h = jax.nn.relu(gat(x, p["w1"], p["aw1"], p["b1"]))
    h = jax.nn.relu(gat(h, p["w2"], p["aw2"], p["b2"]))
    mu = gat(h, p["wmu"], p["awmu"], p["bmu"])
    lv = gat(h, p["wlv"], p["awlv"], p["blv"])
    std = 0.1 + jax.nn.softplus(lv)

    m = mlp_params

    def mlp(z):
        a = jax.nn.relu(z @ m["w1"] + m["b1"])
        a = jax.nn.relu(a @ m["w2"] + m["b2"])
        return a @ m["w3"] + m["b3"]

    preds = jnp.stack([mlp(mu + std * eps[i]) for i in range(eps.shape[0])], axis=1)
    return preds.mean(axis=1), mu, lv, (mu, std)


# ---------------------------------------------------------------------------
# Deterministic parameter / input construction
# ---------------------------------------------------------------------------
def init_params(key, f_in, hidden, latent, h1, h2):
    ks = iter(jax.random.split(key, 24))
    g = lambda shape, scale: (scale * jax.random.normal(next(ks), shape)).astype(jnp.float32)

    def gat_p(fi, fo):
        # w:[fi,fo], aw:[fo,2] = [a_src | a_dst], b:[1,fo]
        return g((fi, fo), 0.3), g((fo, 2), 0.3), jnp.zeros((1, fo), jnp.float32)

    enc = {}
    enc["w1"], enc["aw1"], enc["b1"] = gat_p(f_in, hidden)
    enc["w2"], enc["aw2"], enc["b2"] = gat_p(hidden, hidden)
    enc["wmu"], enc["awmu"], enc["bmu"] = gat_p(hidden, latent)
    enc["wlv"], enc["awlv"], enc["blv"] = gat_p(hidden, latent)

    mlp = {
        "w1": g((latent, h1), 0.3), "b1": g((1, h1), 0.1),
        "w2": g((h1, h2), 0.3),     "b2": g((1, h2), 0.1),
        "w3": g((h2, 1), 0.3),      "b3": g((1, 1), 0.1),
    }
    return enc, mlp


if __name__ == "__main__":
    N, F_IN, HIDDEN, LATENT = 8, 16, 32, 16
    H1, H2, K_SAMPLES = 32, 16, 20

    key = jax.random.PRNGKey(0)
    k_x, k_adj, k_eps, k_p = jax.random.split(key, 4)

    x = jax.random.normal(k_x, (N, F_IN), dtype=jnp.float32)
    # dense symmetric adjacency + self loops (adj[dst, src]); self-loops are required (softmax denom > 0)
    rand_adj = (jax.random.uniform(k_adj, (N, N)) < 0.4).astype(jnp.float32)
    adj = jnp.clip(rand_adj + rand_adj.T + jnp.eye(N, dtype=jnp.float32), 0.0, 1.0)
    # precomputed standard-normal draws for the 20 reparameterized samples
    eps = jax.random.normal(k_eps, (K_SAMPLES, N, LATENT), dtype=jnp.float32)

    enc_params, mlp_params = init_params(k_p, F_IN, HIDDEN, LATENT, H1, H2)

    pack_params, qed_forward = build_qed(N, F_IN, HIDDEN, LATENT, H1, H2, K_SAMPLES)
    pslab = pack_params(enc_params, mlp_params)   # once, outside the per-call forward path

    pred, z_mu, z_log_var, q = qed_forward(x, adj, eps, pslab)
    jax.block_until_ready((pred, z_mu, z_log_var, q))

    pred_r, mu_r, lv_r, q_r = qed_forward_ref(x, adj, eps, enc_params, mlp_params)
    assert jnp.allclose(z_mu, mu_r, atol=5e-4, rtol=5e-4)
    assert jnp.allclose(z_log_var, lv_r, atol=5e-4, rtol=5e-4)
    assert jnp.allclose(q[1], q_r[1], atol=5e-4, rtol=5e-4)
    assert jnp.allclose(pred, pred_r, atol=1e-3, rtol=1e-3)

    print("KERNEL_OK")
</pallas_src>

<mosaic_0001>
module attributes {stable_mosaic.version = 11 : i64} {
  func.func @kernel(%arg0: memref<8x16xf32, #tpu.memory_space<vmem>>, %arg1: memref<8x8xf32, #tpu.memory_space<vmem>>, %arg2: memref<16x160xf32, #tpu.memory_space<vmem>>, %arg3: memref<304x32xf32, #tpu.memory_space<vmem>>, %arg4: memref<8x49xf32, #tpu.memory_space<vmem>>) attributes {dimension_semantics = [], scalar_prefetch = 0 : i64, scratch_operands = 0 : i64, tpu.core_type = #tpu.core_type<tc>} {
    %c0 = arith.constant 0 : index
    %c0_0 = arith.constant 0 : index
    %0 = vector.load %arg0[%c0, %c0_0] : memref<8x16xf32, #tpu.memory_space<vmem>>, vector<8x16xf32>
    %c0_1 = arith.constant 0 : index
    %c0_2 = arith.constant 0 : index
    %1 = vector.load %arg1[%c0_1, %c0_2] : memref<8x8xf32, #tpu.memory_space<vmem>>, vector<8x8xf32>
    %c0_3 = arith.constant 0 : index
    %c0_4 = arith.constant 0 : index
    %2 = vector.load %arg3[%c0_3, %c0_4] : memref<304x32xf32, #tpu.memory_space<vmem>>, vector<16x32xf32>
    %cst = arith.constant dense<0.000000e+00> : vector<8x32xf32>
    %3 = tpu.matmul %0, %2, %cst {dimension_numbers = #tpu.dot_dimension_numbers<[1], [0], [0], [1], [0, 0, 1, 1], [], []>} : vector<8x16xf32>, vector<16x32xf32>, vector<8x32xf32> -> vector<8x32xf32>
    %c80 = arith.constant 80 : index
    %c0_5 = arith.constant 0 : index
    %4 = vector.load %arg3[%c80, %c0_5] : memref<304x32xf32, #tpu.memory_space<vmem>>, vector<16x2xf32>
    %cst_6 = arith.constant dense<0.000000e+00> : vector<8x2xf32>
    %5 = tpu.matmul %0, %4, %cst_6 {dimension_numbers = #tpu.dot_dimension_numbers<[1], [0], [0], [1], [0, 0, 1, 1], [], []>} : vector<8x16xf32>, vector<16x2xf32>, vector<8x2xf32> -> vector<8x2xf32>
    %6 = vector.extract_strided_slice %5 {offsets = [0, 0], sizes = [8, 1], strides = [1, 1]} : vector<8x2xf32> to vector<8x1xf32>
    %7 = vector.extract_strided_slice %5 {offsets = [0, 1], sizes = [8, 1], strides = [1, 1]} : vector<8x2xf32> to vector<8x1xf32>
    %8 = tpu.transpose %6, [1, 0] : vector<8x1xf32> -> vector<1x8xf32>
    %9 = vector.broadcast %7 : vector<8x1xf32> to vector<8x8xf32>
    %10 = vector.broadcast %8 : vector<1x8xf32> to vector<8x8xf32>
    %11 = arith.addf %9, %10 : vector<8x8xf32>
    %cst_7 = arith.constant 0.000000e+00 : f32
    %12 = vector.broadcast %cst_7 : f32 to vector<8x8xf32>
    %13 = arith.cmpf oge, %11, %12 : vector<8x8xf32>
    %cst_8 = arith.constant 2.000000e-01 : f32
    %14 = vector.broadcast %cst_8 : f32 to vector<8x8xf32>
    %15 = arith.mulf %14, %11 : vector<8x8xf32>
    %16 = arith.select %13, %11, %15 : vector<8x8xi1>, vector<8x8xf32>
    %cst_9 = arith.constant 5.000000e-01 : f32
    %17 = vector.broadcast %cst_9 : f32 to vector<8x8xf32>
    %18 = arith.cmpf ogt, %1, %17 : vector<8x8xf32>
    %cst_10 = arith.constant -1.000000e+30 : f32
    %19 = vector.broadcast %cst_10 : f32 to vector<8x8xf32>
    %20 = arith.select %18, %16, %19 : vector<8x8xi1>, vector<8x8xf32>
    %cst_11 = arith.constant dense<0xFF800000> : vector<8xf32>
    %21 = vector.multi_reduction <maximumf>, %20, %cst_11 [1] : vector<8x8xf32> to vector<8xf32>
    %22 = vector.shape_cast %21 : vector<8xf32> to vector<8x1xf32>
    %23 = vector.broadcast %22 : vector<8x1xf32> to vector<8x8xf32>
    %24 = arith.subf %20, %23 : vector<8x8xf32>
    %25 = math.exp %24 : vector<8x8xf32>
    %26 = arith.mulf %25, %1 : vector<8x8xf32>
    %cst_12 = arith.constant dense<0.000000e+00> : vector<8xf32>
    %27 = vector.multi_reduction <add>, %26, %cst_12 [1] : vector<8x8xf32> to vector<8xf32>
    %28 = vector.shape_cast %27 : vector<8xf32> to vector<8x1xf32>
    %29 = tpu.reciprocal %28 {approx = true} : vector<8x1xf32> -> vector<8x1xf32>
    %30 = arith.mulf %28, %29 : vector<8x1xf32>
    %cst_13 = arith.constant 2.000000e+00 : f32
    %31 = vector.broadcast %cst_13 : f32 to vector<8x1xf32>
    %32 = arith.subf %31, %30 : vector<8x1xf32>
    %33 = arith.mulf %29, %32 : vector<8x1xf32>
    %34 = vector.broadcast %33 : vector<8x1xf32> to vector<8x8xf32>
    %35 = arith.mulf %26, %34 : vector<8x8xf32>
    %cst_14 = arith.constant dense<0.000000e+00> : vector<8x32xf32>
    %36 = tpu.matmul %35, %3, %cst_14 {dimension_numbers = #tpu.dot_dimension_numbers<[1], [0], [0], [1], [0, 0, 1, 1], [], []>} : vector<8x8xf32>, vector<8x32xf32>, vector<8x32xf32> -> vector<8x32xf32>
    %c160 = arith.constant 160 : index
    %c0_15 = arith.constant 0 : index
    %37 = vector.load %arg3[%c160, %c0_15] : memref<304x32xf32, #tpu.memory_space<vmem>>, vector<1x32xf32>
    %38 = vector.broadcast %37 : vector<1x32xf32> to vector<8x32xf32>
    %39 = arith.addf %36, %38 : vector<8x32xf32>
    %cst_16 = arith.constant 0.000000e+00 : f32
    %40 = vector.broadcast %cst_16 : f32 to vector<8x32xf32>
    %41 = arith.maximumf %39, %40 : vector<8x32xf32>
    %c16 = arith.constant 16 : index
    %c0_17 = arith.constant 0 : index
    %42 = vector.load %arg3[%c16, %c0_17] : memref<304x32xf32, #tpu.memory_space<vmem>>, vector<32x32xf32>
    %cst_18 = arith.constant dense<0.000000e+00> : vector<8x32xf32>
    %43 = tpu.matmul %41, %42, %cst_18 {dimension_numbers = #tpu.dot_dimension_numbers<[1], [0], [0], [1], [0, 0, 1, 1], [], []>} : vector<8x32xf32>, vector<32x32xf32>, vector<8x32xf32> -> vector<8x32xf32>
    %c96 = arith.constant 96 : index
    %c0_19 = arith.constant 0 : index
    %44 = vector.load %arg3[%c96, %c0_19] : memref<304x32xf32, #tpu.memory_space<vmem>>, vector<32x2xf32>
    %cst_20 = arith.constant dense<0.000000e+00> : vector<8x2xf32>
    %45 = tpu.matmul %41, %44, %cst_20 {dimension_numbers = #tpu.dot_dimension_numbers<[1], [0], [0], [1], [0, 0, 1, 1], [], []>} : vector<8x32xf32>, vector<32x2xf32>, vector<8x2xf32> -> vector<8x2xf32>
    %46 = vector.extract_strided_slice %45 {offsets = [0, 0], sizes = [8, 1], strides = [1, 1]} : vector<8x2xf32> to vector<8x1xf32>
    %47 = vector.extract_strided_slice %45 {offsets = [0, 1], sizes = [8, 1], strides = [1, 1]} : vector<8x2xf32> to vector<8x1xf32>
    %48 = tpu.transpose %46, [1, 0] : vector<8x1xf32> -> vector<1x8xf32>
    %49 = vector.broadcast %47 : vector<8x1xf32> to vector<8x8xf32>
    %50 = vector.broadcast %48 : vector<1x8xf32> to vector<8x8xf32>
    %51 = arith.addf %49, %50 : vector<8x8xf32>
    %cst_21 = arith.constant 0.000000e+00 : f32
    %52 = vector.broadcast %cst_21 : f32 to vector<8x8xf32>
    %53 = arith.cmpf oge, %51, %52 : vector<8x8xf32>
    %cst_22 = arith.constant 2.000000e-01 : f32
    %54 = vector.broadcast %cst_22 : f32 to vector<8x8xf32>
    %55 = arith.mulf %54, %51 : vector<8x8xf32>
    %56 = arith.select %53, %51, %55 : vector<8x8xi1>, vector<8x8xf32>
    %cst_23 = arith.constant 5.000000e-01 : f32
    %57 = vector.broadcast %cst_23 : f32 to vector<8x8xf32>
    %58 = arith.cmpf ogt, %1, %57 : vector<8x8xf32>
    %cst_24 = arith.constant -1.000000e+30 : f32
    %59 = vector.broadcast %cst_24 : f32 to vector<8x8xf32>
    %60 = arith.select %58, %56, %59 : vector<8x8xi1>, vector<8x8xf32>
    %cst_25 = arith.constant dense<0xFF800000> : vector<8xf32>
    %61 = vector.multi_reduction <maximumf>, %60, %cst_25 [1] : vector<8x8xf32> to vector<8xf32>
    %62 = vector.shape_cast %61 : vector<8xf32> to vector<8x1xf32>
    %63 = vector.broadcast %62 : vector<8x1xf32> to vector<8x8xf32>
    %64 = arith.subf %60, %63 : vector<8x8xf32>
    %65 = math.exp %64 : vector<8x8xf32>
    %66 = arith.mulf %65, %1 : vector<8x8xf32>
    %cst_26 = arith.constant dense<0.000000e+00> : vector<8xf32>
    %67 = vector.multi_reduction <add>, %66, %cst_26 [1] : vector<8x8xf32> to vector<8xf32>
    %68 = vector.shape_cast %67 : vector<8xf32> to vector<8x1xf32>
    %69 = tpu.reciprocal %68 {approx = true} : vector<8x1xf32> -> vector<8x1xf32>
    %70 = arith.mulf %68, %69 : vector<8x1xf32>
    %cst_27 = arith.constant 2.000000e+00 : f32
    %71 = vector.broadcast %cst_27 : f32 to vector<8x1xf32>
    %72 = arith.subf %71, %70 : vector<8x1xf32>
    %73 = arith.mulf %69, %72 : vector<8x1xf32>
    %74 = vector.broadcast %73 : vector<8x1xf32> to vector<8x8xf32>
    %75 = arith.mulf %66, %74 : vector<8x8xf32>
    %cst_28 = arith.constant dense<0.000000e+00> : vector<8x32xf32>
    %76 = tpu.matmul %75, %43, %cst_28 {dimension_numbers = #tpu.dot_dimension_numbers<[1], [0], [0], [1], [0, 0, 1, 1], [], []>} : vector<8x8xf32>, vector<8x32xf32>, vector<8x32xf32> -> vector<8x32xf32>
    %c168 = arith.constant 168 : index
    %c0_29 = arith.constant 0 : index
    %77 = vector.load %arg3[%c168, %c0_29] : memref<304x32xf32, #tpu.memory_space<vmem>>, vector<1x32xf32>
    %78 = vector.broadcast %77 : vector<1x32xf32> to vector<8x32xf32>
    %79 = arith.addf %76, %78 : vector<8x32xf32>
    %cst_30 = arith.constant 0.000000e+00 : f32
    %80 = vector.broadcast %cst_30 : f32 to vector<8x32xf32>
    %81 = arith.maximumf %79, %80 : vector<8x32xf32>
    %c48 = arith.constant 48 : index
    %c0_31 = arith.constant 0 : index
    %82 = vector.load %arg3[%c48, %c0_31] : memref<304x32xf32, #tpu.memory_space<vmem>>, vector<32x32xf32>
    %cst_32 = arith.constant dense<0.000000e+00> : vector<8x32xf32>
    %83 = tpu.matmul %81, %82, %cst_32 {dimension_numbers = #tpu.dot_dimension_numbers<[1], [0], [0], [1], [0, 0, 1, 1], [], []>} : vector<8x32xf32>, vector<32x32xf32>, vector<8x32xf32> -> vector<8x32xf32>
    %c128 = arith.constant 128 : index
    %c0_33 = arith.constant 0 : index
    %84 = vector.load %arg3[%c128, %c0_33] : memref<304x32xf32, #tpu.memory_space<vmem>>, vector<32x4xf32>
    %cst_34 = arith.constant dense<0.000000e+00> : vector<8x4xf32>
    %85 = tpu.matmul %81, %84, %cst_34 {dimension_numbers = #tpu.dot_dimension_numbers<[1], [0], [0], [1], [0, 0, 1, 1], [], []>} : vector<8x32xf32>, vector<32x4xf32>, vector<8x4xf32> -> vector<8x4xf32>
    %c176 = arith.constant 176 : index
    %c0_35 = arith.constant 0 : index
    %86 = vector.load %arg3[%c176, %c0_35] : memref<304x32xf32, #tpu.memory_space<vmem>>, vector<1x32xf32>
    %87 = vector.extract_strided_slice %83 {offsets = [0, 0], sizes = [8, 16], strides = [1, 1]} : vector<8x32xf32> to vector<8x16xf32>
    %88 = vector.extract_strided_slice %85 {offsets = [0, 0], sizes = [8, 1], strides = [1, 1]} : vector<8x4xf32> to vector<8x1xf32>
    %89 = vector.extract_strided_slice %85 {offsets = [0, 1], sizes = [8, 1], strides = [1, 1]} : vector<8x4xf32> to vector<8x1xf32>
    %90 = tpu.transpose %88, [1, 0] : vector<8x1xf32> -> vector<1x8xf32>
    %91 = vector.broadcast %89 : vector<8x1xf32> to vector<8x8xf32>
    %92 = vector.broadcast %90 : vector<1x8xf32> to vector<8x8xf32>
    %93 = arith.addf %91, %92 : vector<8x8xf32>
    %cst_36 = arith.constant 0.000000e+00 : f32
    %94 = vector.broadcast %cst_36 : f32 to vector<8x8xf32>
    %95 = arith.cmpf oge, %93, %94 : vector<8x8xf32>
    %cst_37 = arith.constant 2.000000e-01 : f32
    %96 = vector.broadcast %cst_37 : f32 to vector<8x8xf32>
    %97 = arith.mulf %96, %93 : vector<8x8xf32>
    %98 = arith.select %95, %93, %97 : vector<8x8xi1>, vector<8x8xf32>
    %cst_38 = arith.constant 5.000000e-01 : f32
    %99 = vector.broadcast %cst_38 : f32 to vector<8x8xf32>
    %100 = arith.cmpf ogt, %1, %99 : vector<8x8xf32>
    %cst_39 = arith.constant -1.000000e+30 : f32
    %101 = vector.broadcast %cst_39 : f32 to vector<8x8xf32>
    %102 = arith.select %100, %98, %101 : vector<8x8xi1>, vector<8x8xf32>
    %cst_40 = arith.constant dense<0xFF800000> : vector<8xf32>
    %103 = vector.multi_reduction <maximumf>, %102, %cst_40 [1] : vector<8x8xf32> to vector<8xf32>
    %104 = vector.shape_cast %103 : vector<8xf32> to vector<8x1xf32>
    %105 = vector.broadcast %104 : vector<8x1xf32> to vector<8x8xf32>
    %106 = arith.subf %102, %105 : vector<8x8xf32>
    %107 = math.exp %106 : vector<8x8xf32>
    %108 = arith.mulf %107, %1 : vector<8x8xf32>
    %cst_41 = arith.constant dense<0.000000e+00> : vector<8xf32>
    %109 = vector.multi_reduction <add>, %108, %cst_41 [1] : vector<8x8xf32> to vector<8xf32>
    %110 = vector.shape_cast %109 : vector<8xf32> to vector<8x1xf32>
    %111 = tpu.reciprocal %110 {approx = true} : vector<8x1xf32> -> vector<8x1xf32>
    %112 = arith.mulf %110, %111 : vector<8x1xf32>
    %cst_42 = arith.constant 2.000000e+00 : f32
    %113 = vector.broadcast %cst_42 : f32 to vector<8x1xf32>
    %114 = arith.subf %113, %112 : vector<8x1xf32>
    %115 = arith.mulf %111, %114 : vector<8x1xf32>
    %116 = vector.broadcast %115 : vector<8x1xf32> to vector<8x8xf32>
    %117 = arith.mulf %108, %116 : vector<8x8xf32>
    %cst_43 = arith.constant dense<0.000000e+00> : vector<8x16xf32>
    %118 = tpu.matmul %117, %87, %cst_43 {dimension_numbers = #tpu.dot_dimension_numbers<[1], [0], [0], [1], [0, 0, 1, 1], [], []>} : vector<8x8xf32>, vector<8x16xf32>, vector<8x16xf32> -> vector<8x16xf32>
    %119 = vector.extract_strided_slice %86 {offsets = [0, 0], sizes = [1, 16], strides = [1, 1]} : vector<1x32xf32> to vector<1x16xf32>
    %120 = vector.broadcast %119 : vector<1x16xf32> to vector<8x16xf32>
    %121 = arith.addf %118, %120 : vector<8x16xf32>
    %122 = vector.extract_strided_slice %83 {offsets = [0, 16], sizes = [8, 16], strides = [1, 1]} : vector<8x32xf32> to vector<8x16xf32>
    %123 = vector.extract_strided_slice %85 {offsets = [0, 2], sizes = [8, 1], strides = [1, 1]} : vector<8x4xf32> to vector<8x1xf32>
    %124 = vector.extract_strided_slice %85 {offsets = [0, 3], sizes = [8, 1], strides = [1, 1]} : vector<8x4xf32> to vector<8x1xf32>
    %125 = tpu.transpose %123, [1, 0] : vector<8x1xf32> -> vector<1x8xf32>
    %126 = vector.broadcast %124 : vector<8x1xf32> to vector<8x8xf32>
    %127 = vector.broadcast %125 : vector<1x8xf32> to vector<8x8xf32>
    %128 = arith.addf %126, %127 : vector<8x8xf32>
    %cst_44 = arith.constant 0.000000e+00 : f32
    %129 = vector.broadcast %cst_44 : f32 to vector<8x8xf32>
    %130 = arith.cmpf oge, %128, %129 : vector<8x8xf32>
    %cst_45 = arith.constant 2.000000e-01 : f32
    %131 = vector.broadcast %cst_45 : f32 to vector<8x8xf32>
    %132 = arith.mulf %131, %128 : vector<8x8xf32>
    %133 = arith.select %130, %128, %132 : vector<8x8xi1>, vector<8x8xf32>
    %cst_46 = arith.constant 5.000000e-01 : f32
    %134 = vector.broadcast %cst_46 : f32 to vector<8x8xf32>
    %135 = arith.cmpf ogt, %1, %134 : vector<8x8xf32>
    %cst_47 = arith.constant -1.000000e+30 : f32
    %136 = vector.broadcast %cst_47 : f32 to vector<8x8xf32>
    %137 = arith.select %135, %133, %136 : vector<8x8xi1>, vector<8x8xf32>
    %cst_48 = arith.constant dense<0xFF800000> : vector<8xf32>
    %138 = vector.multi_reduction <maximumf>, %137, %cst_48 [1] : vector<8x8xf32> to vector<8xf32>
    %139 = vector.shape_cast %138 : vector<8xf32> to vector<8x1xf32>
    %140 = vector.broadcast %139 : vector<8x1xf32> to vector<8x8xf32>
    %141 = arith.subf %137, %140 : vector<8x8xf32>
    %142 = math.exp %141 : vector<8x8xf32>
    %143 = arith.mulf %142, %1 : vector<8x8xf32>
    %cst_49 = arith.constant dense<0.000000e+00> : vector<8xf32>
    %144 = vector.multi_reduction <add>, %143, %cst_49 [1] : vector<8x8xf32> to vector<8xf32>
    %145 = vector.shape_cast %144 : vector<8xf32> to vector<8x1xf32>
    %146 = tpu.reciprocal %145 {approx = true} : vector<8x1xf32> -> vector<8x1xf32>
    %147 = arith.mulf %145, %146 : vector<8x1xf32>
    %cst_50 = arith.constant 2.000000e+00 : f32
    %148 = vector.broadcast %cst_50 : f32 to vector<8x1xf32>
    %149 = arith.subf %148, %147 : vector<8x1xf32>
    %150 = arith.mulf %146, %149 : vector<8x1xf32>
    %151 = vector.broadcast %150 : vector<8x1xf32> to vector<8x8xf32>
    %152 = arith.mulf %143, %151 : vector<8x8xf32>
    %cst_51 = arith.constant dense<0.000000e+00> : vector<8x16xf32>
    %153 = tpu.matmul %152, %122, %cst_51 {dimension_numbers = #tpu.dot_dimension_numbers<[1], [0], [0], [1], [0, 0, 1, 1], [], []>} : vector<8x8xf32>, vector<8x16xf32>, vector<8x16xf32> -> vector<8x16xf32>
    %154 = vector.extract_strided_slice %86 {offsets = [0, 16], sizes = [1, 16], strides = [1, 1]} : vector<1x32xf32> to vector<1x16xf32>
    %155 = vector.broadcast %154 : vector<1x16xf32> to vector<8x16xf32>
    %156 = arith.addf %153, %155 : vector<8x16xf32>
    %cst_52 = arith.constant 0.000000e+00 : f32
    %157 = vector.broadcast %cst_52 : f32 to vector<8x16xf32>
    %158 = arith.maximumf %156, %157 : vector<8x16xf32>
    %159 = math.absf %156 : vector<8x16xf32>
    %cst_53 = arith.constant 0.000000e+00 : f32
    %160 = vector.broadcast %cst_53 : f32 to vector<8x16xf32>
    %161 = arith.subf %160, %159 : vector<8x16xf32>
    %162 = math.exp %161 : vector<8x16xf32>
    %163 = math.log1p %162 : vector<8x16xf32>
    %164 = arith.addf %158, %163 : vector<8x16xf32>
    %cst_54 = arith.constant 1.000000e-01 : f32
    %165 = vector.broadcast %cst_54 : f32 to vector<8x16xf32>
    %166 = arith.addf %165, %164 : vector<8x16xf32>
    %167 = tpu.iota {dimensions = array<i32: 0>} : vector<8x160xi32>
    %168 = tpu.iota {dimensions = array<i32: 1>} : vector<8x160xi32>
    %c7_i32 = arith.constant 7 : i32
    %169 = vector.broadcast %c7_i32 : i32 to vector<8x160xi32>
    %170 = arith.andi %168, %169 : vector<8x160xi32>
    %171 = arith.cmpi eq, %170, %167 : vector<8x160xi32>
    %cst_55 = arith.constant 1.000000e+00 : f32
    %cst_56 = arith.constant 0.000000e+00 : f32
    %172 = vector.broadcast %cst_55 : f32 to vector<8x160xf32>
    %173 = vector.broadcast %cst_56 : f32 to vector<8x160xf32>
    %174 = arith.select %171, %172, %173 : vector<8x160xi1>, vector<8x160xf32>
    %175 = tpu.concatenate %121, %166 in 1 : vector<8x16xf32>, vector<8x16xf32> -> vector<8x32xf32>
    %176 = tpu.transpose %175, [1, 0] : vector<8x32xf32> -> vector<32x8xf32>
    %cst_57 = arith.constant dense<0.000000e+00> : vector<32x160xf32>
    %177 = tpu.matmul %176, %174, %cst_57 {dimension_numbers = #tpu.dot_dimension_numbers<[1], [0], [0], [1], [0, 0, 1, 1], [], []>} : vector<32x8xf32>, vector<8x160xf32>, vector<32x160xf32> -> vector<32x160xf32>
    %178 = vector.extract_strided_slice %177 {offsets = [0, 0], sizes = [16, 160], strides = [1, 1]} : vector<32x160xf32> to vector<16x160xf32>
    %179 = vector.extract_strided_slice %177 {offsets = [16, 0], sizes = [16, 160], strides = [1, 1]} : vector<32x160xf32> to vector<16x160xf32>
    %c0_58 = arith.constant 0 : index
    %c0_59 = arith.constant 0 : index
    %180 = vector.load %arg2[%c0_58, %c0_59] : memref<16x160xf32, #tpu.memory_space<vmem>>, vector<16x160xf32>
    %181 = arith.mulf %179, %180 : vector<16x160xf32>
    %182 = arith.addf %178, %181 : vector<16x160xf32>
    %c184 = arith.constant 184 : index
    %c0_60 = arith.constant 0 : index
    %183 = vector.load %arg3[%c184, %c0_60] : memref<304x32xf32, #tpu.memory_space<vmem>>, vector<32x16xf32>
    %cst_61 = arith.constant dense<0.000000e+00> : vector<32x160xf32>
    %184 = tpu.matmul %183, %182, %cst_61 {dimension_numbers = #tpu.dot_dimension_numbers<[1], [0], [0], [1], [0, 0, 1, 1], [], []>} : vector<32x16xf32>, vector<16x160xf32>, vector<32x160xf32> -> vector<32x160xf32>
    %c248 = arith.constant 248 : index
    %c0_62 = arith.constant 0 : index
    %185 = vector.load %arg3[%c248, %c0_62] : memref<304x32xf32, #tpu.memory_space<vmem>>, vector<32x1xf32>
    %186 = vector.broadcast %185 : vector<32x1xf32> to vector<32x160xf32>
    %187 = arith.addf %184, %186 : vector<32x160xf32>
    %cst_63 = arith.constant 0.000000e+00 : f32
    %188 = vector.broadcast %cst_63 : f32 to vector<32x160xf32>
    %189 = arith.maximumf %187, %188 : vector<32x160xf32>
    %c216 = arith.constant 216 : index
    %c0_64 = arith.constant 0 : index
    %190 = vector.load %arg3[%c216, %c0_64] : memref<304x32xf32, #tpu.memory_space<vmem>>, vector<16x32xf32>
    %cst_65 = arith.constant dense<0.000000e+00> : vector<16x160xf32>
    %191 = tpu.matmul %190, %189, %cst_65 {dimension_numbers = #tpu.dot_dimension_numbers<[1], [0], [0], [1], [0, 0, 1, 1], [], []>} : vector<16x32xf32>, vector<32x160xf32>, vector<16x160xf32> -> vector<16x160xf32>
    %c280 = arith.constant 280 : index
    %c0_66 = arith.constant 0 : index
    %192 = vector.load %arg3[%c280, %c0_66] : memref<304x32xf32, #tpu.memory_space<vmem>>, vector<16x1xf32>
    %193 = vector.broadcast %192 : vector<16x1xf32> to vector<16x160xf32>
    %194 = arith.addf %191, %193 : vector<16x160xf32>
    %cst_67 = arith.constant 0.000000e+00 : f32
    %195 = vector.broadcast %cst_67 : f32 to vector<16x160xf32>
    %196 = arith.maximumf %194, %195 : vector<16x160xf32>
    %cst_68 = arith.constant dense<0.000000e+00> : vector<8x16xf32>
    %197 = tpu.matmul %174, %196, %cst_68 {dimension_numbers = #tpu.dot_dimension_numbers<[1], [1], [0], [0], [0, 0, 1, 0], [], []>} : vector<8x160xf32>, vector<16x160xf32>, vector<8x16xf32> -> vector<8x16xf32>
    %c232 = arith.constant 232 : index
    %c0_69 = arith.constant 0 : index
    %198 = vector.load %arg3[%c232, %c0_69] : memref<304x32xf32, #tpu.memory_space<vmem>>, vector<16x1xf32>
    %cst_70 = arith.constant dense<0.000000e+00> : vector<8x1xf32>
    %199 = tpu.matmul %197, %198, %cst_70 {dimension_numbers = #tpu.dot_dimension_numbers<[1], [0], [0], [1], [0, 0, 1, 1], [], []>} : vector<8x16xf32>, vector<16x1xf32>, vector<8x1xf32> -> vector<8x1xf32>
    %c296 = arith.constant 296 : index
    %c0_71 = arith.constant 0 : index
    %200 = vector.load %arg3[%c296, %c0_71] : memref<304x32xf32, #tpu.memory_space<vmem>>, vector<1x1xf32>
    %201 = vector.broadcast %200 : vector<1x1xf32> to vector<8x1xf32>
    %202 = arith.addf %199, %201 : vector<8x1xf32>
    %c0_72 = arith.constant 0 : index
    %c0_73 = arith.constant 0 : index
    %203 = vector.load %arg4[%c0_72, %c0_73] : memref<8x49xf32, #tpu.memory_space<vmem>>, vector<8x16xf32>
    tpu.vector_store %arg4[%c0_72, %c0_73], %121 {strides = array<i32>} : memref<8x49xf32, #tpu.memory_space<vmem>>, vector<8x16xf32>,
    %c0_74 = arith.constant 0 : index
    %c16_75 = arith.constant 16 : index
    %204 = vector.load %arg4[%c0_74, %c16_75] : memref<8x49xf32, #tpu.memory_space<vmem>>, vector<8x16xf32>
    tpu.vector_store %arg4[%c0_74, %c16_75], %156 {strides = array<i32>} : memref<8x49xf32, #tpu.memory_space<vmem>>, vector<8x16xf32>,
    %c0_76 = arith.constant 0 : index
    %c32 = arith.constant 32 : index
    %205 = vector.load %arg4[%c0_76, %c32] : memref<8x49xf32, #tpu.memory_space<vmem>>, vector<8x16xf32>
    tpu.vector_store %arg4[%c0_76, %c32], %166 {strides = array<i32>} : memref<8x49xf32, #tpu.memory_space<vmem>>, vector<8x16xf32>,
    %c0_77 = arith.constant 0 : index
    %c48_78 = arith.constant 48 : index
    %206 = vector.load %arg4[%c0_77, %c48_78] : memref<8x49xf32, #tpu.memory_space<vmem>>, vector<8x1xf32>
    tpu.vector_store %arg4[%c0_77, %c48_78], %202 {strides = array<i32>} : memref<8x49xf32, #tpu.memory_space<vmem>>, vector<8x1xf32>,
    return
  }
}

</mosaic_0001>

<llo_original>
// kernel: forward.1
$region0: #{forward.1}
  #allocation0 [shape = 'u32[]', space=smem, size = 0x4, offset = 0x4, fixed_abs, tag = 'smem constant byte address 0x4 - core index']
  #allocation1 [shape = 'u32[144,128]{1,0:T(1,128)}', space=vmem, size = 0x12000, scoped, tag = 'internal scratch']
  %s0 = inlined_call_operand.vmem [shape: f32[8,16], index: 0, kind: input, shape index: {}]
  %s1 = inlined_call_operand.vmem [shape: f32[8,8], index: 1, kind: input, shape index: {}]
  %s2 = inlined_call_operand.vmem [shape: f32[16,160], index: 2, kind: input, shape index: {}]
  %s3 = inlined_call_operand.vmem [shape: f32[304,32], index: 3, kind: input, shape index: {}]
  %s4 = inlined_call_operand.vmem [shape: f32[8,49], index: 4, kind: output, shape index: {}]
  %s5 = sld [smem:[#allocation0]]
  $region26: #{forward.1} parent=0
    _
  %s7 = ssub.s32 1, %s5
  %s8 = scalar_select 0, %s7, %s5
  // Predicated region
  $region2: #{forward.1} parent=0 // pred_check
    _
  $region3: #{forward.1} parent=0 // pred_check_branch
    %10 = sbr.rel (0) target = $region5
  $region4: #{forward.1} parent=0 // pred_region
    _
  $region5: #{forward.1} parent=0 // pred_fallthru
    _
  // Predicated region
  $region6: #{forward.1} parent=0 // pred_check
    _
  $region7: #{forward.1} parent=0 // pred_check_branch
    %12 = sbr.rel (0) target = $region9
  $region8: #{forward.1} parent=0 // pred_region
    _
  $region9: #{forward.1} parent=0 // pred_fallthru
    _
  // Predicated region
  $region10: #{forward.1} parent=0 // pred_check
    _
  $region11: #{forward.1} parent=0 // pred_check_branch
    %14 = sbr.rel (0) target = $region13
  $region12: #{forward.1} parent=0 // pred_region
    _
  $region13: #{forward.1} parent=0 // pred_fallthru
    _
  // Predicated region
  $region14: #{forward.1} parent=0 // pred_check
    _
  $region15: #{forward.1} parent=0 // pred_check_branch
    %16 = sbr.rel (0) target = $region17
  $region16: #{forward.1} parent=0 // pred_region
    _
  $region17: #{forward.1} parent=0 // pred_fallthru
    _
  %v17 = vld [vmem:[%s0] sm:$0xff]
  %v18 = vld [vmem:[%s1] sm:$0xff]
  %v19 = vld [vmem:[%s3] sm:$0xff]
  %v20 = vld [vmem:[%s3 + $0x8] sm:$0xff]
  %vm21 = vcmask 130048
  %v23 = vsel %vm21, %v17, 0
  %25 = vmatprep.subr.mxu0 0.0
  %26 = vmatpush1.msra.mxu0 0.0
  %27 = vmatprep.subr.mxu0 0.0
  %28 = vmatpush1.msra.mxu0 0.0
  %29 = vmatprep.subr.mxu0 0.0
  %30 = vmatpush1.msra.mxu0 0.0
  %31 = vmatprep.subr.mxu0 0.0
  %32 = vmatpush1.msra.mxu0 0.0
  %33 = vmatprep.subr.mxu0 0.0
  %34 = vmatpush1.msra.mxu0 0.0
  %35 = vmatprep.subr.mxu0 0.0
  %36 = vmatpush1.msra.mxu0 0.0
  %37 = vmatprep.subr.mxu0 0.0
  %38 = vmatpush1.msra.mxu0 0.0
  %39 = vmatprep.subr.mxu0 0.0
  %40 = vmatpush1.msra.mxu0 0.0
  %41 = vmatprep.subr.mxu0 0.0
  %42 = vmatpush1.msra.mxu0 0.0
  %43 = vmatprep.subr.mxu0 0.0
  %44 = vmatpush1.msra.mxu0 0.0
  %45 = vmatprep.subr.mxu0 0.0
  %46 = vmatpush1.msra.mxu0 0.0
  %47 = vmatprep.subr.mxu0 0.0
  %48 = vmatpush1.msra.mxu0 0.0
  %49 = vmatprep.subr.mxu0 0.0
  %50 = vmatpush1.msra.mxu0 0.0
  %51 = vmatprep.subr.mxu0 0.0
  %52 = vmatpush1.msra.mxu0 0.0
  %53 = vmatprep.subr.mxu0 0.0
  %54 = vmatpush1.msra.mxu0 %v20
  %55 = vmatprep.subr.mxu0 0.0
  %56 = vmatpush1.msra.mxu0 %v19
  %57 = vmatprep.subr.mxu0 0.0
  %58 = vmatpush2.msra.mxu0 0.0
  %59 = vmatprep.subr.mxu0 0.0
  %60 = vmatpush2.msra.mxu0 0.0
  %61 = vmatprep.subr.mxu0 0.0
  %62 = vmatpush2.msra.mxu0 0.0
  %63 = vmatprep.subr.mxu0 0.0
  %64 = vmatpush2.msra.mxu0 0.0
  %65 = vmatprep.subr.mxu0 0.0
  %66 = vmatpush2.msra.mxu0 0.0
  %67 = vmatprep.subr.mxu0 0.0
  %68 = vmatpush2.msra.mxu0 0.0
  %69 = vmatprep.subr.mxu0 0.0
  %70 = vmatpush2.msra.mxu0 0.0
  %71 = vmatprep.subr.mxu0 0.0
  %72 = vmatpush2.msra.mxu0 0.0
  %73 = vmatprep.subr.mxu0 0.0
  %74 = vmatpush2.msra.mxu0 0.0
  %75 = vmatprep.subr.mxu0 0.0
  %76 = vmatpush2.msra.mxu0 0.0
  %77 = vmatprep.subr.mxu0 0.0
  %78 = vmatpush2.msra.mxu0 0.0
  %79 = vmatprep.subr.mxu0 0.0
  %80 = vmatpush2.msra.mxu0 0.0
  %81 = vmatprep.subr.mxu0 0.0
  %82 = vmatpush2.msra.mxu0 0.0
  %83 = vmatprep.subr.mxu0 0.0
  %84 = vmatpush2.msra.mxu0 0.0
  %85 = vmatprep.subr.mxu0 0.0
  %86 = vmatpush2.msra.mxu0 0.0
  %87 = vmatprep.subr.mxu0 0.0
  %88 = vmatpush2.msra.mxu0 0.0
  %89 = vmatprep.mubr.f32.mxu0 0.0
  %90 = vmatmul.mubr.f32.gmra.mxu0 %v23
  %v91 = vpop.f32.mrf.mxu0
  %v92 = vadd.f32 0.0, %v91
  %v93 = vpop.f32.mrf.mxu0
  %94 = vdwg.mxu0
  %v95 = vld [vmem:[%s3 + $0x50] sm:$0xff]
  %v96 = vld [vmem:[%s3 + $0x58] sm:$0xff]
  %97 = vmatprep.subr.mxu0 0.0
  %98 = vmatpush1.msra.mxu0 0.0
  %99 = vmatprep.subr.mxu0 0.0
  %100 = vmatpush1.msra.mxu0 0.0
  %101 = vmatprep.subr.mxu0 0.0
  %102 = vmatpush1.msra.mxu0 0.0
  %103 = vmatprep.subr.mxu0 0.0
  %104 = vmatpush1.msra.mxu0 0.0
  %105 = vmatprep.subr.mxu0 0.0
  %106 = vmatpush1.msra.mxu0 0.0
  %107 = vmatprep.subr.mxu0 0.0
  %108 = vmatpush1.msra.mxu0 0.0
  %109 = vmatprep.subr.mxu0 0.0
  %110 = vmatpush1.msra.mxu0 0.0
  %111 = vmatprep.subr.mxu0 0.0
  %112 = vmatpush1.msra.mxu0 0.0
  %113 = vmatprep.subr.mxu0 0.0
  %114 = vmatpush1.msra.mxu0 0.0
  %115 = vmatprep.subr.mxu0 0.0
  %116 = vmatpush1.msra.mxu0 0.0
  %117 = vmatprep.subr.mxu0 0.0
  %118 = vmatpush1.msra.mxu0 0.0
  %119 = vmatprep.subr.mxu0 0.0
  %120 = vmatpush1.msra.mxu0 0.0
  %121 = vmatprep.subr.mxu0 0.0
  %122 = vmatpush1.msra.mxu0 0.0
  %123 = vmatprep.subr.mxu0 0.0
  %124 = vmatpush1.msra.mxu0 0.0
  %125 = vmatprep.subr.mxu0 0.0
  %126 = vmatpush1.msra.mxu0 %v96
  %127 = vmatprep.subr.mxu0 0.0
  %128 = vmatpush1.msra.mxu0 %v95
  %129 = vmatprep.subr.mxu0 0.0
  %130 = vmatpush2.msra.mxu0 0.0
  %131 = vmatprep.subr.mxu0 0.0
  %132 = vmatpush2.msra.mxu0 0.0
  %133 = vmatprep.subr.mxu0 0.0
  %134 = vmatpush2.msra.mxu0 0.0
  %135 = vmatprep.subr.mxu0 0.0
  %136 = vmatpush2.msra.mxu0 0.0
  %137 = vmatprep.subr.mxu0 0.0
  %138 = vmatpush2.msra.mxu0 0.0
  %139 = vmatprep.subr.mxu0 0.0
  %140 = vmatpush2.msra.mxu0 0.0
  %141 = vmatprep.subr.mxu0 0.0
  %142 = vmatpush2.msra.mxu0 0.0
  %143 = vmatprep.subr.mxu0 0.0
  %144 = vmatpush2.msra.mxu0 0.0
  %145 = vmatprep.subr.mxu0 0.0
  %146 = vmatpush2.msra.mxu0 0.0
  %147 = vmatprep.subr.mxu0 0.0
  %148 = vmatpush2.msra.mxu0 0.0
  %149 = vmatprep.subr.mxu0 0.0
  %150 = vmatpush2.msra.mxu0 0.0
  %151 = vmatprep.subr.mxu0 0.0
  %152 = vmatpush2.msra.mxu0 0.0
  %153 = vmatprep.subr.mxu0 0.0
  %154 = vmatpush2.msra.mxu0 0.0
  %155 = vmatprep.subr.mxu0 0.0
  %156 = vmatpush2.msra.mxu0 0.0
  %157 = vmatprep.subr.mxu0 0.0
  %158 = vmatpush2.msra.mxu0 0.0
  %159 = vmatprep.subr.mxu0 0.0
  %160 = vmatpush2.msra.mxu0 0.0
  %161 = vmatprep.mubr.f32.mxu0 0.0
  %162 = vmatmul.mubr.f32.gmra.mxu0 %v23
  %v163 = vpop.f32.mrf.mxu0
  %v164 = vadd.f32 0.0, %v163
  %v165 = vpop.f32.mrf.mxu0
  %166 = vdwg.mxu0
  %167 = vxpose.xlu0.b32.start [1/16] %v164, 128
  %168 = vxpose.xlu0.b32.cont [2/16] 0.0, 128
  %169 = vxpose.xlu0.b32.cont [3/16] 0.0, 128
  %170 = vxpose.xlu0.b32.cont [4/16] 0.0, 128
  %171 = vxpose.xlu0.b32.cont [5/16] 0.0, 128
  %172 = vxpose.xlu0.b32.cont [6/16] 0.0, 128
  %173 = vxpose.xlu0.b32.cont [7/16] 0.0, 128
  %174 = vxpose.xlu0.b32.cont [8/16] 0.0, 128
  %175 = vxpose.xlu0.b32.cont [9/16] 0.0, 128
  %176 = vxpose.xlu0.b32.cont [10/16] 0.0, 128
  %177 = vxpose.xlu0.b32.cont [11/16] 0.0, 128
  %178 = vxpose.xlu0.b32.cont [12/16] 0.0, 128
  %179 = vxpose.xlu0.b32.cont [13/16] 0.0, 128
  %180 = vxpose.xlu0.b32.cont [14/16] 0.0, 128
  %181 = vxpose.xlu0.b32.cont [15/16] 0.0, 128
  %182 = vxpose.xlu0.b32.end [16/16] 0.0, 128
  %v183 = vpop.trf.xlu0
  %v184 = vpop.trf.xlu0
  %v185 = vpop.trf.xlu0
  %v186 = vpop.trf.xlu0
  %v187 = vpop.trf.xlu0
  %v188 = vpop.trf.xlu0
  %v189 = vpop.trf.xlu0
  %v190 = vpop.trf.xlu0
  %v191 = vpop.trf.xlu0
  %v192 = vpop.trf.xlu0
  %v193 = vpop.trf.xlu0
  %v194 = vpop.trf.xlu0
  %v195 = vpop.trf.xlu0
  %v196 = vpop.trf.xlu0
  %v197 = vpop.trf.xlu0
  %v198 = vpop.trf.xlu0
  %200 = vset.pattern.permute.xlu0 1
  %201 = vperm.xlu0 %200, %v164
  %v202 = vpop.permute.xlu0 %201
  %v204 = vlaneseq
  %v205 = vshrl.u32 %v204, 7
  %v206 = vsub.s32 0, %v205
  %v207 = vrot.slane %v183, %v206
  %v208 = vadd.f32 %v202, %v207
  %vm209 = vcmp.ge.f32.partialorder %v208, 0.0
  %v210 = vmul.f32 %v208, 0.2
  %v211 = vsel %vm209, %v208, %v210
  %vm212 = vcmp.gt.f32.partialorder %v18, 0.5
  %v213 = vsel %vm212, %v211, -1e+30
  %vm214 = vcmask 64512
  %v215 = vsel %vm214, %v213, -inf
  %216 = vmax.xlane.f32.xlu0 %v215
  %v217 = vpop.xlane.xlu0 %216
  %v218 = vsub.f32 %v213, %v217
  %v219 = vmul.f32 %v218, 1.442695
  %v220 = vpow.pop %v219
  %v221 = vmul.f32 %v220, %v18
  %v222 = vsel %vm214, %v221, 0.0
  %223 = vadd.xlane.f32.xlu0 %v222
  %v224 = vpop.xlane.xlu0 %223
  %v225 = vrcp.pop %v224
  %v226 = vmul.f32 %v224, %v225
  %v227 = vsub.f32 2.0, %v226
  %v228 = vmul.f32 %v225, %v227
  %v229 = vmul.f32 %v221, %v228
  %v230 = vld [vmem:[%s3 + $0xa0] sm:$0x1]
  %v231 = vlaneseq
  %v232 = vshrl.u32 %v231, 7
  %v233 = vsub.s32 0, %v232
  %v234 = vrot.slane %v230, %v233
  %v236 = vsel %vm214, %v229, 0
  %238 = vmatprep.subr.mxu0 0.0
  %239 = vmatpush1.msra.mxu0 0.0
  %240 = vmatprep.subr.mxu0 0.0
  %241 = vmatpush1.msra.mxu0 0.0
  %242 = vmatprep.subr.mxu0 0.0
  %243 = vmatpush1.msra.mxu0 0.0
  %244 = vmatprep.subr.mxu0 0.0
  %245 = vmatpush1.msra.mxu0 0.0
  %246 = vmatprep.subr.mxu0 0.0
  %247 = vmatpush1.msra.mxu0 0.0
  %248 = vmatprep.subr.mxu0 0.0
  %249 = vmatpush1.msra.mxu0 0.0
  %250 = vmatprep.subr.mxu0 0.0
  %251 = vmatpush1.msra.mxu0 0.0
  %252 = vmatprep.subr.mxu0 0.0
  %253 = vmatpush1.msra.mxu0 0.0
  %254 = vmatprep.subr.mxu0 0.0
  %255 = vmatpush1.msra.mxu0 0.0
  %256 = vmatprep.subr.mxu0 0.0
  %257 = vmatpush1.msra.mxu0 0.0
  %258 = vmatprep.subr.mxu0 0.0
  %259 = vmatpush1.msra.mxu0 0.0
  %260 = vmatprep.subr.mxu0 0.0
  %261 = vmatpush1.msra.mxu0 0.0
  %262 = vmatprep.subr.mxu0 0.0
  %263 = vmatpush1.msra.mxu0 0.0
  %264 = vmatprep.subr.mxu0 0.0
  %265 = vmatpush1.msra.mxu0 0.0
  %266 = vmatprep.subr.mxu0 0.0
  %267 = vmatpush1.msra.mxu0 0.0
  %268 = vmatprep.subr.mxu0 0.0
  %269 = vmatpush1.msra.mxu0 %v92
  %270 = vmatprep.subr.mxu0 0.0
  %271 = vmatpush2.msra.mxu0 0.0
  %272 = vmatprep.subr.mxu0 0.0
  %273 = vmatpush2.msra.mxu0 0.0
  %274 = vmatprep.subr.mxu0 0.0
  %275 = vmatpush2.msra.mxu0 0.0
  %276 = vmatprep.subr.mxu0 0.0
  %277 = vmatpush2.msra.mxu0 0.0
  %278 = vmatprep.subr.mxu0 0.0
  %279 = vmatpush2.msra.mxu0 0.0
  %280 = vmatprep.subr.mxu0 0.0
  %281 = vmatpush2.msra.mxu0 0.0
  %282 = vmatprep.subr.mxu0 0.0
  %283 = vmatpush2.msra.mxu0 0.0
  %284 = vmatprep.subr.mxu0 0.0
  %285 = vmatpush2.msra.mxu0 0.0
  %286 = vmatprep.subr.mxu0 0.0
  %287 = vmatpush2.msra.mxu0 0.0
  %288 = vmatprep.subr.mxu0 0.0
  %289 = vmatpush2.msra.mxu0 0.0
  %290 = vmatprep.subr.mxu0 0.0
  %291 = vmatpush2.msra.mxu0 0.0
  %292 = vmatprep.subr.mxu0 0.0
  %293 = vmatpush2.msra.mxu0 0.0
  %294 = vmatprep.subr.mxu0 0.0
  %295 = vmatpush2.msra.mxu0 0.0
  %296 = vmatprep.subr.mxu0 0.0
  %297 = vmatpush2.msra.mxu0 0.0
  %298 = vmatprep.subr.mxu0 0.0
  %299 = vmatpush2.msra.mxu0 0.0
  %300 = vmatprep.subr.mxu0 0.0
  %301 = vmatpush2.msra.mxu0 0.0
  %302 = vmatprep.mubr.f32.mxu0 0.0
  %303 = vmatmul.mubr.f32.gmra.mxu0 %v236
  %v304 = vpop.f32.mrf.mxu0
  %v305 = vadd.f32 %v234, %v304
  %v306 = vpop.f32.mrf.mxu0
  %307 = vdwg.mxu0
  %v308 = vmax.f32 %v305, 0.0
  %v309 = vld [vmem:[%s3 + $0x10] sm:$0xff]
  %v310 = vld [vmem:[%s3 + $0x18] sm:$0xff]
  %v311 = vld [vmem:[%s3 + $0x20] sm:$0xff]
  %v312 = vld [vmem:[%s3 + $0x28] sm:$0xff]
  %vm313 = vcmask 261120
  %v315 = vsel %vm313, %v308, 0
  %317 = vmatprep.subr.mxu0 0.0
  %318 = vmatpush1.msra.mxu0 0.0
  %319 = vmatprep.subr.mxu0 0.0
  %320 = vmatpush1.msra.mxu0 0.0
  %321 = vmatprep.subr.mxu0 0.0
  %322 = vmatpush1.msra.mxu0 0.0
  %323 = vmatprep.subr.mxu0 0.0
  %324 = vmatpush1.msra.mxu0 0.0
  %325 = vmatprep.subr.mxu0 0.0
  %326 = vmatpush1.msra.mxu0 0.0
  %327 = vmatprep.subr.mxu0 0.0
  %328 = vmatpush1.msra.mxu0 0.0
  %329 = vmatprep.subr.mxu0 0.0
  %330 = vmatpush1.msra.mxu0 0.0
  %331 = vmatprep.subr.mxu0 0.0
  %332 = vmatpush1.msra.mxu0 0.0
  %333 = vmatprep.subr.mxu0 0.0
  %334 = vmatpush1.msra.mxu0 0.0
  %335 = vmatprep.subr.mxu0 0.0
  %336 = vmatpush1.msra.mxu0 0.0
  %337 = vmatprep.subr.mxu0 0.0
  %338 = vmatpush1.msra.mxu0 0.0
  %339 = vmatprep.subr.mxu0 0.0
  %340 = vmatpush1.msra.mxu0 0.0
  %341 = vmatprep.subr.mxu0 0.0
  %342 = vmatpush1.msra.mxu0 %v312
  %343 = vmatprep.subr.mxu0 0.0
  %344 = vmatpush1.msra.mxu0 %v311
  %345 = vmatprep.subr.mxu0 0.0
  %346 = vmatpush1.msra.mxu0 %v310
  %347 = vmatprep.subr.mxu0 0.0
  %348 = vmatpush1.msra.mxu0 %v309
  %349 = vmatprep.subr.mxu0 0.0
  %350 = vmatpush2.msra.mxu0 0.0
  %351 = vmatprep.subr.mxu0 0.0
  %352 = vmatpush2.msra.mxu0 0.0
  %353 = vmatprep.subr.mxu0 0.0
  %354 = vmatpush2.msra.mxu0 0.0
  %355 = vmatprep.subr.mxu0 0.0
  %356 = vmatpush2.msra.mxu0 0.0
  %357 = vmatprep.subr.mxu0 0.0
  %358 = vmatpush2.msra.mxu0 0.0
  %359 = vmatprep.subr.mxu0 0.0
  %360 = vmatpush2.msra.mxu0 0.0
  %361 = vmatprep.subr.mxu0 0.0
  %362 = vmatpush2.msra.mxu0 0.0
  %363 = vmatprep.subr.mxu0 0.0
  %364 = vmatpush2.msra.mxu0 0.0
  %365 = vmatprep.subr.mxu0 0.0
  %366 = vmatpush2.msra.mxu0 0.0
  %367 = vmatprep.subr.mxu0 0.0
  %368 = vmatpush2.msra.mxu0 0.0
  %369 = vmatprep.subr.mxu0 0.0
  %370 = vmatpush2.msra.mxu0 0.0
  %371 = vmatprep.subr.mxu0 0.0
  %372 = vmatpush2.msra.mxu0 0.0
  %373 = vmatprep.subr.mxu0 0.0
  %374 = vmatpush2.msra.mxu0 0.0
  %375 = vmatprep.subr.mxu0 0.0
  %376 = vmatpush2.msra.mxu0 0.0
  %377 = vmatprep.subr.mxu0 0.0
  %378 = vmatpush2.msra.mxu0 0.0
  %379 = vmatprep.subr.mxu0 0.0
  %380 = vmatpush2.msra.mxu0 0.0
  %381 = vmatprep.mubr.f32.mxu0 0.0
  %382 = vmatmul.mubr.f32.gmra.mxu0 %v315
  %v383 = vpop.f32.mrf.mxu0
  %v384 = vadd.f32 0.0, %v383
  %v385 = vpop.f32.mrf.mxu0
  %386 = vdwg.mxu0
  %v387 = vld [vmem:[%s3 + $0x60] sm:$0xff]
  %v388 = vld [vmem:[%s3 + $0x68] sm:$0xff]
  %v389 = vld [vmem:[%s3 + $0x70] sm:$0xff]
  %v390 = vld [vmem:[%s3 + $0x78] sm:$0xff]
  %391 = vmatprep.subr.mxu0 0.0
  %392 = vmatpush1.msra.mxu0 0.0
  %393 = vmatprep.subr.mxu0 0.0
  %394 = vmatpush1.msra.mxu0 0.0
  %395 = vmatprep.subr.mxu0 0.0
  %396 = vmatpush1.msra.mxu0 0.0
  %397 = vmatprep.subr.mxu0 0.0
  %398 = vmatpush1.msra.mxu0 0.0
  %399 = vmatprep.subr.mxu0 0.0
  %400 = vmatpush1.msra.mxu0 0.0
  %401 = vmatprep.subr.mxu0 0.0
  %402 = vmatpush1.msra.mxu0 0.0
  %403 = vmatprep.subr.mxu0 0.0
  %404 = vmatpush1.msra.mxu0 0.0
  %405 = vmatprep.subr.mxu0 0.0
  %406 = vmatpush1.msra.mxu0 0.0
  %407 = vmatprep.subr.mxu0 0.0
  %408 = vmatpush1.msra.mxu0 0.0
  %409 = vmatprep.subr.mxu0 0.0
  %410 = vmatpush1.msra.mxu0 0.0
  %411 = vmatprep.subr.mxu0 0.0
  %412 = vmatpush1.msra.mxu0 0.0
  %413 = vmatprep.subr.mxu0 0.0
  %414 = vmatpush1.msra.mxu0 0.0
  %415 = vmatprep.subr.mxu0 0.0
  %416 = vmatpush1.msra.mxu0 %v390
  %417 = vmatprep.subr.mxu0 0.0
  %418 = vmatpush1.msra.mxu0 %v389
  %419 = vmatprep.subr.mxu0 0.0
  %420 = vmatpush1.msra.mxu0 %v388
  %421 = vmatprep.subr.mxu0 0.0
  %422 = vmatpush1.msra.mxu0 %v387
  %423 = vmatprep.subr.mxu0 0.0
  %424 = vmatpush2.msra.mxu0 0.0
  %425 = vmatprep.subr.mxu0 0.0
  %426 = vmatpush2.msra.mxu0 0.0
  %427 = vmatprep.subr.mxu0 0.0
  %428 = vmatpush2.msra.mxu0 0.0
  %429 = vmatprep.subr.mxu0 0.0
  %430 = vmatpush2.msra.mxu0 0.0
  %431 = vmatprep.subr.mxu0 0.0
  %432 = vmatpush2.msra.mxu0 0.0
  %433 = vmatprep.subr.mxu0 0.0
  %434 = vmatpush2.msra.mxu0 0.0
  %435 = vmatprep.subr.mxu0 0.0
  %436 = vmatpush2.msra.mxu0 0.0
  %437 = vmatprep.subr.mxu0 0.0
  %438 = vmatpush2.msra.mxu0 0.0
  %439 = vmatprep.subr.mxu0 0.0
  %440 = vmatpush2.msra.mxu0 0.0
  %441 = vmatprep.subr.mxu0 0.0
  %442 = vmatpush2.msra.mxu0 0.0
  %443 = vmatprep.subr.mxu0 0.0
  %444 = vmatpush2.msra.mxu0 0.0
  %445 = vmatprep.subr.mxu0 0.0
  %446 = vmatpush2.msra.mxu0 0.0
  %447 = vmatprep.subr.mxu0 0.0
  %448 = vmatpush2.msra.mxu0 0.0
  %449 = vmatprep.subr.mxu0 0.0
  %450 = vmatpush2.msra.mxu0 0.0
  %451 = vmatprep.subr.mxu0 0.0
  %452 = vmatpush2.msra.mxu0 0.0
  %453 = vmatprep.subr.mxu0 0.0
  %454 = vmatpush2.msra.mxu0 0.0
  %455 = vmatprep.mubr.f32.mxu0 0.0
  %456 = vmatmul.mubr.f32.gmra.mxu0 %v315
  %v457 = vpop.f32.mrf.mxu0
  %v458 = vadd.f32 0.0, %v457
  %v459 = vpop.f32.mrf.mxu0
  %460 = vdwg.mxu0
  %461 = vxpose.xlu0.b32.start [1/16] %v458, 128
  %462 = vxpose.xlu0.b32.cont [2/16] 0.0, 128
  %463 = vxpose.xlu0.b32.cont [3/16] 0.0, 128
  %464 = vxpose.xlu0.b32.cont [4/16] 0.0, 128
  %465 = vxpose.xlu0.b32.cont [5/16] 0.0, 128
  %466 = vxpose.xlu0.b32.cont [6/16] 0.0, 128
  %467 = vxpose.xlu0.b32.cont [7/16] 0.0, 128
  %468 = vxpose.xlu0.b32.cont [8/16] 0.0, 128
  %469 = vxpose.xlu0.b32.cont [9/16] 0.0, 128
  %470 = vxpose.xlu0.b32.cont [10/16] 0.0, 128
  %471 = vxpose.xlu0.b32.cont [11/16] 0.0, 128
  %472 = vxpose.xlu0.b32.cont [12/16] 0.0, 128
  %473 = vxpose.xlu0.b32.cont [13/16] 0.0, 128
  %474 = vxpose.xlu0.b32.cont [14/16] 0.0, 128
  %475 = vxpose.xlu0.b32.cont [15/16] 0.0, 128
  %476 = vxpose.xlu0.b32.end [16/16] 0.0, 128
  %v477 = vpop.trf.xlu0
  %v478 = vpop.trf.xlu0
  %v479 = vpop.trf.xlu0
  %v480 = vpop.trf.xlu0
  %v481 = vpop.trf.xlu0
  %v482 = vpop.trf.xlu0
  %v483 = vpop.trf.xlu0
  %v484 = vpop.trf.xlu0
  %v485 = vpop.trf.xlu0
  %v486 = vpop.trf.xlu0
  %v487 = vpop.trf.xlu0
  %v488 = vpop.trf.xlu0
  %v489 = vpop.trf.xlu0
  %v490 = vpop.trf.xlu0
  %v491 = vpop.trf.xlu0
  %v492 = vpop.trf.xlu0
  %494 = vset.pattern.permute.xlu0 1
  %495 = vperm.xlu0 %494, %v458
  %v496 = vpop.permute.xlu0 %495
  %v498 = vlaneseq
  %v499 = vshrl.u32 %v498, 7
  %v500 = vsub.s32 0, %v499
  %v501 = vrot.slane %v477, %v500
  %v502 = vadd.f32 %v496, %v501
  %vm503 = vcmp.ge.f32.partialorder %v502, 0.0
  %v504 = vmul.f32 %v502, 0.2
  %v505 = vsel %vm503, %v502, %v504
  %v506 = vsel %vm212, %v505, -1e+30
  %v507 = vsel %vm214, %v506, -inf
  %508 = vmax.xlane.f32.xlu0 %v507
  %v509 = vpop.xlane.xlu0 %508
  %v510 = vsub.f32 %v506, %v509
  %v511 = vmul.f32 %v510, 1.442695
  %v512 = vpow.pop %v511
  %v513 = vmul.f32 %v512, %v18
  %v514 = vsel %vm214, %v513, 0.0
  %515 = vadd.xlane.f32.xlu0 %v514
  %v516 = vpop.xlane.xlu0 %515
  %v517 = vrcp.pop %v516
  %v518 = vmul.f32 %v516, %v517
  %v519 = vsub.f32 2.0, %v518
  %v520 = vmul.f32 %v517, %v519
  %v521 = vmul.f32 %v513, %v520
  %v522 = vld [vmem:[%s3 + $0xa8] sm:$0x1]
  %v523 = vlaneseq
  %v524 = vshrl.u32 %v523, 7
  %v525 = vsub.s32 0, %v524
  %v526 = vrot.slane %v522, %v525
  %v528 = vsel %vm214, %v521, 0
  %530 = vmatprep.subr.mxu0 0.0
  %531 = vmatpush1.msra.mxu0 0.0
  %532 = vmatprep.subr.mxu0 0.0
  %533 = vmatpush1.msra.mxu0 0.0
  %534 = vmatprep.subr.mxu0 0.0
  %535 = vmatpush1.msra.mxu0 0.0
  %536 = vmatprep.subr.mxu0 0.0
  %537 = vmatpush1.msra.mxu0 0.0
  %538 = vmatprep.subr.mxu0 0.0
  %539 = vmatpush1.msra.mxu0 0.0
  %540 = vmatprep.subr.mxu0 0.0
  %541 = vmatpush1.msra.mxu0 0.0
  %542 = vmatprep.subr.mxu0 0.0
  %543 = vmatpush1.msra.mxu0 0.0
  %544 = vmatprep.subr.mxu0 0.0
  %545 = vmatpush1.msra.mxu0 0.0
  %546 = vmatprep.subr.mxu0 0.0
  %547 = vmatpush1.msra.mxu0 0.0
  %548 = vmatprep.subr.mxu0 0.0
  %549 = vmatpush1.msra.mxu0 0.0
  %550 = vmatprep.subr.mxu0 0.0
  %551 = vmatpush1.msra.mxu0 0.0
  %552 = vmatprep.subr.mxu0 0.0
  %553 = vmatpush1.msra.mxu0 0.0
  %554 = vmatprep.subr.mxu0 0.0
  %555 = vmatpush1.msra.mxu0 0.0
  %556 = vmatprep.subr.mxu0 0.0
  %557 = vmatpush1.msra.mxu0 0.0
  %558 = vmatprep.subr.mxu0 0.0
  %559 = vmatpush1.msra.mxu0 0.0
  %560 = vmatprep.subr.mxu0 0.0
  %561 = vmatpush1.msra.mxu0 %v384
  %562 = vmatprep.subr.mxu0 0.0
  %563 = vmatpush2.msra.mxu0 0.0
  %564 = vmatprep.subr.mxu0 0.0
  %565 = vmatpush2.msra.mxu0 0.0
  %566 = vmatprep.subr.mxu0 0.0
  %567 = vmatpush2.msra.mxu0 0.0
  %568 = vmatprep.subr.mxu0 0.0
  %569 = vmatpush2.msra.mxu0 0.0
  %570 = vmatprep.subr.mxu0 0.0
  %571 = vmatpush2.msra.mxu0 0.0
  %572 = vmatprep.subr.mxu0 0.0
  %573 = vmatpush2.msra.mxu0 0.0
  %574 = vmatprep.subr.mxu0 0.0
  %575 = vmatpush2.msra.mxu0 0.0
  %576 = vmatprep.subr.mxu0 0.0
  %577 = vmatpush2.msra.mxu0 0.0
  %578 = vmatprep.subr.mxu0 0.0
  %579 = vmatpush2.msra.mxu0 0.0
  %580 = vmatprep.subr.mxu0 0.0
  %581 = vmatpush2.msra.mxu0 0.0
  %582 = vmatprep.subr.mxu0 0.0
  %583 = vmatpush2.msra.mxu0 0.0
  %584 = vmatprep.subr.mxu0 0.0
  %585 = vmatpush2.msra.mxu0 0.0
  %586 = vmatprep.subr.mxu0 0.0
  %587 = vmatpush2.msra.mxu0 0.0
  %588 = vmatprep.subr.mxu0 0.0
  %589 = vmatpush2.msra.mxu0 0.0
  %590 = vmatprep.subr.mxu0 0.0
  %591 = vmatpush2.msra.mxu0 0.0
  %592 = vmatprep.subr.mxu0 0.0
  %593 = vmatpush2.msra.mxu0 0.0
  %594 = vmatprep.mubr.f32.mxu0 0.0
  %595 = vmatmul.mubr.f32.gmra.mxu0 %v528
  %v596 = vpop.f32.mrf.mxu0
  %v597 = vadd.f32 %v526, %v596
  %v598 = vpop.f32.mrf.mxu0
  %599 = vdwg.mxu0
  %v600 = vmax.f32 %v597, 0.0
  %v601 = vld [vmem:[%s3 + $0x30] sm:$0xff]
  %v602 = vld [vmem:[%s3 + $0x38] sm:$0xff]
  %v603 = vld [vmem:[%s3 + $0x40] sm:$0xff]
  %v604 = vld [vmem:[%s3 + $0x48] sm:$0xff]
  %v606 = vsel %vm313, %v600, 0
  %608 = vmatprep.subr.mxu0 0.0
  %609 = vmatpush1.msra.mxu0 0.0
  %610 = vmatprep.subr.mxu0 0.0
  %611 = vmatpush1.msra.mxu0 0.0
  %612 = vmatprep.subr.mxu0 0.0
  %613 = vmatpush1.msra.mxu0 0.0
  %614 = vmatprep.subr.mxu0 0.0
  %615 = vmatpush1.msra.mxu0 0.0
  %616 = vmatprep.subr.mxu0 0.0
  %617 = vmatpush1.msra.mxu0 0.0
  %618 = vmatprep.subr.mxu0 0.0
  %619 = vmatpush1.msra.mxu0 0.0
  %620 = vmatprep.subr.mxu0 0.0
  %621 = vmatpush1.msra.mxu0 0.0
  %622 = vmatprep.subr.mxu0 0.0
  %623 = vmatpush1.msra.mxu0 0.0
  %624 = vmatprep.subr.mxu0 0.0
  %625 = vmatpush1.msra.mxu0 0.0
  %626 = vmatprep.subr.mxu0 0.0
  %627 = vmatpush1.msra.mxu0 0.0
  %628 = vmatprep.subr.mxu0 0.0
  %629 = vmatpush1.msra.mxu0 0.0
  %630 = vmatprep.subr.mxu0 0.0
  %631 = vmatpush1.msra.mxu0 0.0
  %632 = vmatprep.subr.mxu0 0.0
  %633 = vmatpush1.msra.mxu0 %v604
  %634 = vmatprep.subr.mxu0 0.0
  %635 = vmatpush1.msra.mxu0 %v603
  %636 = vmatprep.subr.mxu0 0.0
  %637 = vmatpush1.msra.mxu0 %v602
  %638 = vmatprep.subr.mxu0 0.0
  %639 = vmatpush1.msra.mxu0 %v601
  %640 = vmatprep.subr.mxu0 0.0
  %641 = vmatpush2.msra.mxu0 0.0
  %642 = vmatprep.subr.mxu0 0.0
  %643 = vmatpush2.msra.mxu0 0.0
  %644 = vmatprep.subr.mxu0 0.0
  %645 = vmatpush2.msra.mxu0 0.0
  %646 = vmatprep.subr.mxu0 0.0
  %647 = vmatpush2.msra.mxu0 0.0
  %648 = vmatprep.subr.mxu0 0.0
  %649 = vmatpush2.msra.mxu0 0.0
  %650 = vmatprep.subr.mxu0 0.0
  %651 = vmatpush2.msra.mxu0 0.0
  %652 = vmatprep.subr.mxu0 0.0
  %653 = vmatpush2.msra.mxu0 0.0
  %654 = vmatprep.subr.mxu0 0.0
  %655 = vmatpush2.msra.mxu0 0.0
  %656 = vmatprep.subr.mxu0 0.0
  %657 = vmatpush2.msra.mxu0 0.0
  %658 = vmatprep.subr.mxu0 0.0
  %659 = vmatpush2.msra.mxu0 0.0
  %660 = vmatprep.subr.mxu0 0.0
  %661 = vmatpush2.msra.mxu0 0.0
  %662 = vmatprep.subr.mxu0 0.0
  %663 = vmatpush2.msra.mxu0 0.0
  %664 = vmatprep.subr.mxu0 0.0
  %665 = vmatpush2.msra.mxu0 0.0
  %666 = vmatprep.subr.mxu0 0.0
  %667 = vmatpush2.msra.mxu0 0.0
  %668 = vmatprep.subr.mxu0 0.0
  %669 = vmatpush2.msra.mxu0 0.0
  %670 = vmatprep.subr.mxu0 0.0
  %671 = vmatpush2.msra.mxu0 0.0
  %672 = vmatprep.mubr.f32.mxu0 0.0
  %673 = vmatmul.mubr.f32.gmra.mxu0 %v606
  %v674 = vpop.f32.mrf.mxu0
  %v675 = vadd.f32 0.0, %v674
  %v676 = vpop.f32.mrf.mxu0
  %677 = vdwg.mxu0
  %v678 = vld [vmem:[%s3 + $0x80] sm:$0xff]
  %v679 = vld [vmem:[%s3 + $0x88] sm:$0xff]
  %v680 = vld [vmem:[%s3 + $0x90] sm:$0xff]
  %v681 = vld [vmem:[%s3 + $0x98] sm:$0xff]
  %682 = vmatprep.subr.mxu0 0.0
  %683 = vmatpush1.msra.mxu0 0.0
  %684 = vmatprep.subr.mxu0 0.0
  %685 = vmatpush1.msra.mxu0 0.0
  %686 = vmatprep.subr.mxu0 0.0
  %687 = vmatpush1.msra.mxu0 0.0
  %688 = vmatprep.subr.mxu0 0.0
  %689 = vmatpush1.msra.mxu0 0.0
  %690 = vmatprep.subr.mxu0 0.0
  %691 = vmatpush1.msra.mxu0 0.0
  %692 = vmatprep.subr.mxu0 0.0
  %693 = vmatpush1.msra.mxu0 0.0
  %694 = vmatprep.subr.mxu0 0.0
  %695 = vmatpush1.msra.mxu0 0.0
  %696 = vmatprep.subr.mxu0 0.0
  %697 = vmatpush1.msra.mxu0 0.0
  %698 = vmatprep.subr.mxu0 0.0
  %699 = vmatpush1.msra.mxu0 0.0
  %700 = vmatprep.subr.mxu0 0.0
  %701 = vmatpush1.msra.mxu0 0.0
  %702 = vmatprep.subr.mxu0 0.0
  %703 = vmatpush1.msra.mxu0 0.0
  %704 = vmatprep.subr.mxu0 0.0
  %705 = vmatpush1.msra.mxu0 0.0
  %706 = vmatprep.subr.mxu0 0.0
  %707 = vmatpush1.msra.mxu0 %v681
  %708 = vmatprep.subr.mxu0 0.0
  %709 = vmatpush1.msra.mxu0 %v680
  %710 = vmatprep.subr.mxu0 0.0
  %711 = vmatpush1.msra.mxu0 %v679
  %712 = vmatprep.subr.mxu0 0.0
  %713 = vmatpush1.msra.mxu0 %v678
  %714 = vmatprep.subr.mxu0 0.0
  %715 = vmatpush2.msra.mxu0 0.0
  %716 = vmatprep.subr.mxu0 0.0
  %717 = vmatpush2.msra.mxu0 0.0
  %718 = vmatprep.subr.mxu0 0.0
  %719 = vmatpush2.msra.mxu0 0.0
  %720 = vmatprep.subr.mxu0 0.0
  %721 = vmatpush2.msra.mxu0 0.0
  %722 = vmatprep.subr.mxu0 0.0
  %723 = vmatpush2.msra.mxu0 0.0
  %724 = vmatprep.subr.mxu0 0.0
  %725 = vmatpush2.msra.mxu0 0.0
  %726 = vmatprep.subr.mxu0 0.0
  %727 = vmatpush2.msra.mxu0 0.0
  %728 = vmatprep.subr.mxu0 0.0
  %729 = vmatpush2.msra.mxu0 0.0
  %730 = vmatprep.subr.mxu0 0.0
  %731 = vmatpush2.msra.mxu0 0.0
  %732 = vmatprep.subr.mxu0 0.0
  %733 = vmatpush2.msra.mxu0 0.0
  %734 = vmatprep.subr.mxu0 0.0
  %735 = vmatpush2.msra.mxu0 0.0
  %736 = vmatprep.subr.mxu0 0.0
  %737 = vmatpush2.msra.mxu0 0.0
  %738 = vmatprep.subr.mxu0 0.0
  %739 = vmatpush2.msra.mxu0 0.0
  %740 = vmatprep.subr.mxu0 0.0
  %741 = vmatpush2.msra.mxu0 0.0
  %742 = vmatprep.subr.mxu0 0.0
  %743 = vmatpush2.msra.mxu0 0.0
  %744 = vmatprep.subr.mxu0 0.0
  %745 = vmatpush2.msra.mxu0 0.0
  %746 = vmatprep.mubr.f32.mxu0 0.0
  %747 = vmatmul.mubr.f32.gmra.mxu0 %v606
  %v748 = vpop.f32.mrf.mxu0
  %v749 = vadd.f32 0.0, %v748
  %v750 = vpop.f32.mrf.mxu0
  %751 = vdwg.mxu0
  %v752 = vld [vmem:[%s3 + $0xb0] sm:$0x1]
  %753 = vxpose.xlu0.b32.start [1/16] %v749, 128
  %754 = vxpose.xlu0.b32.cont [2/16] 0.0, 128
  %755 = vxpose.xlu0.b32.cont [3/16] 0.0, 128
  %756 = vxpose.xlu0.b32.cont [4/16] 0.0, 128
  %757 = vxpose.xlu0.b32.cont [5/16] 0.0, 128
  %758 = vxpose.xlu0.b32.cont [6/16] 0.0, 128
  %759 = vxpose.xlu0.b32.cont [7/16] 0.0, 128
  %760 = vxpose.xlu0.b32.cont [8/16] 0.0, 128
  %761 = vxpose.xlu0.b32.cont [9/16] 0.0, 128
  %762 = vxpose.xlu0.b32.cont [10/16] 0.0, 128
  %763 = vxpose.xlu0.b32.cont [11/16] 0.0, 128
  %764 = vxpose.xlu0.b32.cont [12/16] 0.0, 128
  %765 = vxpose.xlu0.b32.cont [13/16] 0.0, 128
  %766 = vxpose.xlu0.b32.cont [14/16] 0.0, 128
  %767 = vxpose.xlu0.b32.cont [15/16] 0.0, 128
  %768 = vxpose.xlu0.b32.end [16/16] 0.0, 128
  %v769 = vpop.trf.xlu0
  %v770 = vpop.trf.xlu0
  %v771 = vpop.trf.xlu0
  %v772 = vpop.trf.xlu0
  %v773 = vpop.trf.xlu0
  %v774 = vpop.trf.xlu0
  %v775 = vpop.trf.xlu0
  %v776 = vpop.trf.xlu0
  %v777 = vpop.trf.xlu0
  %v778 = vpop.trf.xlu0
  %v779 = vpop.trf.xlu0
  %v780 = vpop.trf.xlu0
  %v781 = vpop.trf.xlu0
  %v782 = vpop.trf.xlu0
  %v783 = vpop.trf.xlu0
  %v784 = vpop.trf.xlu0
  %786 = vset.pattern.permute.xlu0 1
  %787 = vperm.xlu0 %786, %v749
  %v788 = vpop.permute.xlu0 %787
  %v790 = vlaneseq
  %v791 = vshrl.u32 %v790, 7
  %v792 = vsub.s32 0, %v791
  %v793 = vrot.slane %v769, %v792
  %v794 = vadd.f32 %v788, %v793
  %vm795 = vcmp.ge.f32.partialorder %v794, 0.0
  %v796 = vmul.f32 %v794, 0.2
  %v797 = vsel %vm795, %v794, %v796
  %v798 = vsel %vm212, %v797, -1e+30
  %v799 = vsel %vm214, %v798, -inf
  %800 = vmax.xlane.f32.xlu0 %v799
  %v801 = vpop.xlane.xlu0 %800
  %v802 = vsub.f32 %v798, %v801
  %v803 = vmul.f32 %v802, 1.442695
  %v804 = vpow.pop %v803
  %v805 = vmul.f32 %v804, %v18
  %v806 = vsel %vm214, %v805, 0.0
  %807 = vadd.xlane.f32.xlu0 %v806
  %v808 = vpop.xlane.xlu0 %807
  %v809 = vrcp.pop %v808
  %v810 = vmul.f32 %v808, %v809
  %v811 = vsub.f32 2.0, %v810
  %v812 = vmul.f32 %v809, %v811
  %v813 = vmul.f32 %v805, %v812
  %v814 = vlaneseq
  %v815 = vshrl.u32 %v814, 7
  %v816 = vsub.s32 0, %v815
  %v817 = vrot.slane %v752, %v816
  %v819 = vsel %vm214, %v813, 0
  %821 = vmatprep.subr.mxu0 0.0
  %822 = vmatpush1.msra.mxu0 0.0
  %823 = vmatprep.subr.mxu0 0.0
  %824 = vmatpush1.msra.mxu0 0.0
  %825 = vmatprep.subr.mxu0 0.0
  %826 = vmatpush1.msra.mxu0 0.0
  %827 = vmatprep.subr.mxu0 0.0
  %828 = vmatpush1.msra.mxu0 0.0
  %829 = vmatprep.subr.mxu0 0.0
  %830 = vmatpush1.msra.mxu0 0.0
  %831 = vmatprep.subr.mxu0 0.0
  %832 = vmatpush1.msra.mxu0 0.0
  %833 = vmatprep.subr.mxu0 0.0
  %834 = vmatpush1.msra.mxu0 0.0
  %835 = vmatprep.subr.mxu0 0.0
  %836 = vmatpush1.msra.mxu0 0.0
  %837 = vmatprep.subr.mxu0 0.0
  %838 = vmatpush1.msra.mxu0 0.0
  %839 = vmatprep.subr.mxu0 0.0
  %840 = vmatpush1.msra.mxu0 0.0
  %841 = vmatprep.subr.mxu0 0.0
  %842 = vmatpush1.msra.mxu0 0.0
  %843 = vmatprep.subr.mxu0 0.0
  %844 = vmatpush1.msra.mxu0 0.0
  %845 = vmatprep.subr.mxu0 0.0
  %846 = vmatpush1.msra.mxu0 0.0
  %847 = vmatprep.subr.mxu0 0.0
  %848 = vmatpush1.msra.mxu0 0.0
  %849 = vmatprep.subr.mxu0 0.0
  %850 = vmatpush1.msra.mxu0 0.0
  %851 = vmatprep.subr.mxu0 0.0
  %852 = vmatpush1.msra.mxu0 %v675
  %853 = vmatprep.subr.mxu0 0.0
  %854 = vmatpush2.msra.mxu0 0.0
  %855 = vmatprep.subr.mxu0 0.0
  %856 = vmatpush2.msra.mxu0 0.0
  %857 = vmatprep.subr.mxu0 0.0
  %858 = vmatpush2.msra.mxu0 0.0
  %859 = vmatprep.subr.mxu0 0.0
  %860 = vmatpush2.msra.mxu0 0.0
  %861 = vmatprep.subr.mxu0 0.0
  %862 = vmatpush2.msra.mxu0 0.0
  %863 = vmatprep.subr.mxu0 0.0
  %864 = vmatpush2.msra.mxu0 0.0
  %865 = vmatprep.subr.mxu0 0.0
  %866 = vmatpush2.msra.mxu0 0.0
  %867 = vmatprep.subr.mxu0 0.0
  %868 = vmatpush2.msra.mxu0 0.0
  %869 = vmatprep.subr.mxu0 0.0
  %870 = vmatpush2.msra.mxu0 0.0
  %871 = vmatprep.subr.mxu0 0.0
  %872 = vmatpush2.msra.mxu0 0.0
  %873 = vmatprep.subr.mxu0 0.0
  %874 = vmatpush2.msra.mxu0 0.0
  %875 = vmatprep.subr.mxu0 0.0
  %876 = vmatpush2.msra.mxu0 0.0
  %877 = vmatprep.subr.mxu0 0.0
  %878 = vmatpush2.msra.mxu0 0.0
  %879 = vmatprep.subr.mxu0 0.0
  %880 = vmatpush2.msra.mxu0 0.0
  %881 = vmatprep.subr.mxu0 0.0
  %882 = vmatpush2.msra.mxu0 0.0
  %883 = vmatprep.subr.mxu0 0.0
  %884 = vmatpush2.msra.mxu0 0.0
  %885 = vmatprep.mubr.f32.mxu0 0.0
  %886 = vmatmul.mubr.f32.gmra.mxu0 %v819
  %v887 = vpop.f32.mrf.mxu0
  %v888 = vadd.f32 %v817, %v887
  %v889 = vpop.f32.mrf.mxu0
  %890 = vdwg.mxu0
  %891 = vrot.lane.b32.xlu0 %v749, 126
  %v892 = vpop.permute.xlu0 %891
  %894 = vxpose.xlu0.b32.start [1/16] %v892, 128
  %895 = vxpose.xlu0.b32.cont [2/16] 0.0, 128
  %896 = vxpose.xlu0.b32.cont [3/16] 0.0, 128
  %897 = vxpose.xlu0.b32.cont [4/16] 0.0, 128
  %898 = vxpose.xlu0.b32.cont [5/16] 0.0, 128
  %899 = vxpose.xlu0.b32.cont [6/16] 0.0, 128
  %900 = vxpose.xlu0.b32.cont [7/16] 0.0, 128
  %901 = vxpose.xlu0.b32.cont [8/16] 0.0, 128
  %902 = vxpose.xlu0.b32.cont [9/16] 0.0, 128
  %903 = vxpose.xlu0.b32.cont [10/16] 0.0, 128
  %904 = vxpose.xlu0.b32.cont [11/16] 0.0, 128
  %905 = vxpose.xlu0.b32.cont [12/16] 0.0, 128
  %906 = vxpose.xlu0.b32.cont [13/16] 0.0, 128
  %907 = vxpose.xlu0.b32.cont [14/16] 0.0, 128
  %908 = vxpose.xlu0.b32.cont [15/16] 0.0, 128
  %909 = vxpose.xlu0.b32.end [16/16] 0.0, 128
  %v910 = vpop.trf.xlu0
  %v911 = vpop.trf.xlu0
  %v912 = vpop.trf.xlu0
  %v913 = vpop.trf.xlu0
  %v914 = vpop.trf.xlu0
  %v915 = vpop.trf.xlu0
  %v916 = vpop.trf.xlu0
  %v917 = vpop.trf.xlu0
  %v918 = vpop.trf.xlu0
  %v919 = vpop.trf.xlu0
  %v920 = vpop.trf.xlu0
  %v921 = vpop.trf.xlu0
  %v922 = vpop.trf.xlu0
  %v923 = vpop.trf.xlu0
  %v924 = vpop.trf.xlu0
  %v925 = vpop.trf.xlu0
  %926 = vset.pattern.permute.xlu0 3
  %927 = vperm.xlu0 %926, %v749
  %v928 = vpop.permute.xlu0 %927
  %v930 = vlaneseq
  %v931 = vshrl.u32 %v930, 7
  %v932 = vsub.s32 0, %v931
  %v933 = vrot.slane %v910, %v932
  %v934 = vadd.f32 %v928, %v933
  %vm935 = vcmp.ge.f32.partialorder %v934, 0.0
  %v936 = vmul.f32 %v934, 0.2
  %v937 = vsel %vm935, %v934, %v936
  %v938 = vsel %vm212, %v937, -1e+30
  %v939 = vsel %vm214, %v938, -inf
  %940 = vmax.xlane.f32.xlu0 %v939
  %v941 = vpop.xlane.xlu0 %940
  %v942 = vsub.f32 %v938, %v941
  %v943 = vmul.f32 %v942, 1.442695
  %v944 = vpow.pop %v943
  %v945 = vmul.f32 %v944, %v18
  %v946 = vsel %vm214, %v945, 0.0
  %947 = vadd.xlane.f32.xlu0 %v946
  %v948 = vpop.xlane.xlu0 %947
  %v949 = vrcp.pop %v948
  %v950 = vmul.f32 %v948, %v949
  %v951 = vsub.f32 2.0, %v950
  %v952 = vmul.f32 %v949, %v951
  %v953 = vmul.f32 %v945, %v952
  %955 = vrot.lane.b32.xlu0 %v675, 112
  %v956 = vpop.permute.xlu0 %955
  %959 = vrot.lane.b32.xlu0 %v817, 112
  %v960 = vpop.permute.xlu0 %959
  %v963 = vsel %vm214, %v953, 0
  %965 = vmatprep.subr.mxu0 0.0
  %966 = vmatpush1.msra.mxu0 0.0
  %967 = vmatprep.subr.mxu0 0.0
  %968 = vmatpush1.msra.mxu0 0.0
  %969 = vmatprep.subr.mxu0 0.0
  %970 = vmatpush1.msra.mxu0 0.0
  %971 = vmatprep.subr.mxu0 0.0
  %972 = vmatpush1.msra.mxu0 0.0
  %973 = vmatprep.subr.mxu0 0.0
  %974 = vmatpush1.msra.mxu0 0.0
  %975 = vmatprep.subr.mxu0 0.0
  %976 = vmatpush1.msra.mxu0 0.0
  %977 = vmatprep.subr.mxu0 0.0
  %978 = vmatpush1.msra.mxu0 0.0
  %979 = vmatprep.subr.mxu0 0.0
  %980 = vmatpush1.msra.mxu0 0.0
  %981 = vmatprep.subr.mxu0 0.0
  %982 = vmatpush1.msra.mxu0 0.0
  %983 = vmatprep.subr.mxu0 0.0
  %984 = vmatpush1.msra.mxu0 0.0
  %985 = vmatprep.subr.mxu0 0.0
  %986 = vmatpush1.msra.mxu0 0.0
  %987 = vmatprep.subr.mxu0 0.0
  %988 = vmatpush1.msra.mxu0 0.0
  %989 = vmatprep.subr.mxu0 0.0
  %990 = vmatpush1.msra.mxu0 0.0
  %991 = vmatprep.subr.mxu0 0.0
  %992 = vmatpush1.msra.mxu0 0.0
  %993 = vmatprep.subr.mxu0 0.0
  %994 = vmatpush1.msra.mxu0 0.0
  %995 = vmatprep.subr.mxu0 0.0
  %996 = vmatpush1.msra.mxu0 %v956
  %997 = vmatprep.subr.mxu0 0.0
  %998 = vmatpush2.msra.mxu0 0.0
  %999 = vmatprep.subr.mxu0 0.0
  %1000 = vmatpush2.msra.mxu0 0.0
  %1001 = vmatprep.subr.mxu0 0.0
  %1002 = vmatpush2.msra.mxu0 0.0
  %1003 = vmatprep.subr.mxu0 0.0
  %1004 = vmatpush2.msra.mxu0 0.0
  %1005 = vmatprep.subr.mxu0 0.0
  %1006 = vmatpush2.msra.mxu0 0.0
  %1007 = vmatprep.subr.mxu0 0.0
  %1008 = vmatpush2.msra.mxu0 0.0
  %1009 = vmatprep.subr.mxu0 0.0
  %1010 = vmatpush2.msra.mxu0 0.0
  %1011 = vmatprep.subr.mxu0 0.0
  %1012 = vmatpush2.msra.mxu0 0.0
  %1013 = vmatprep.subr.mxu0 0.0
  %1014 = vmatpush2.msra.mxu0 0.0
  %1015 = vmatprep.subr.mxu0 0.0
  %1016 = vmatpush2.msra.mxu0 0.0
  %1017 = vmatprep.subr.mxu0 0.0
  %1018 = vmatpush2.msra.mxu0 0.0
  %1019 = vmatprep.subr.mxu0 0.0
  %1020 = vmatpush2.msra.mxu0 0.0
  %1021 = vmatprep.subr.mxu0 0.0
  %1022 = vmatpush2.msra.mxu0 0.0
  %1023 = vmatprep.subr.mxu0 0.0
  %1024 = vmatpush2.msra.mxu0 0.0
  %1025 = vmatprep.subr.mxu0 0.0
  %1026 = vmatpush2.msra.mxu0 0.0
  %1027 = vmatprep.subr.mxu0 0.0
  %1028 = vmatpush2.msra.mxu0 0.0
  %1029 = vmatprep.mubr.f32.mxu0 0.0
  %1030 = vmatmul.mubr.f32.gmra.mxu0 %v963
  %v1031 = vpop.f32.mrf.mxu0
  %v1032 = vadd.f32 %v960, %v1031
  %v1033 = vpop.f32.mrf.mxu0
  %1034 = vdwg.mxu0
  %v1035 = vmax.f32 %v1032, 0.0
  %v1036 = vand.u32 2147483647, %v1032
  %v1037 = vsub.f32 0.0, %v1036
  %v1038 = vmul.f32 %v1037, 1.442695
  %v1039 = vpow.pop %v1038
  %v1040 = vadd.f32 %v1039, 1.0
  %v1041 = vlog2.pop %v1040
  %v1042 = vmul.f32 %v1041, 0.6931472
  %v1043 = vmul.f32 -0.5, %v1039
  %v1044 = vadd.f32 %v1043, 1.0
  %v1045 = vmul.f32 %v1044, %v1039
  %v1046 = vand.u32 2147483647, %v1039
  %vm1047 = vcmp.lt.f32.partialorder %v1046, 0.0004427343
  %v1048 = vsel %vm1047, %v1045, %v1042
  %v1049 = vadd.f32 %v1035, %v1048
  %v1050 = vadd.f32 %v1049, 0.1
  %v1051 = vlaneseq
  %v1052 = vshrl.u32 %v1051, 7
  %v1053 = vlaneseq
  %v1054 = vand.u32 %v1053, 127
  %v1055 = vadd.s32 %v1054, 128
  %v1056 = vand.u32 %v1054, 7
  %v1057 = vand.u32 %v1055, 7
  %vm1058 = vcmp.eq.s32.totalorder %v1056, %v1052
  %vm1059 = vcmp.eq.s32.totalorder %v1057, %v1052
  %v1060 = vsel %vm1058, 1.0, 0.0
  %v1061 = vsel %vm1059, 1.0, 0.0
  %1063 = vrot.lane.b32.xlu0 %v1050, 16
  %v1064 = vpop.permute.xlu0 %1063
  %v1066 = vsel %vm21, %v888, %v1064
  %1067 = vxpose.xlu0.b32.start [1/16] %v1066, 128
  %1068 = vxpose.xlu0.b32.cont [2/16] 0.0, 128
  %1069 = vxpose.xlu0.b32.cont [3/16] 0.0, 128
  %1070 = vxpose.xlu0.b32.cont [4/16] 0.0, 128
  %1071 = vxpose.xlu0.b32.cont [5/16] 0.0, 128
  %1072 = vxpose.xlu0.b32.cont [6/16] 0.0, 128
  %1073 = vxpose.xlu0.b32.cont [7/16] 0.0, 128
  %1074 = vxpose.xlu0.b32.cont [8/16] 0.0, 128
  %1075 = vxpose.xlu0.b32.cont [9/16] 0.0, 128
  %1076 = vxpose.xlu0.b32.cont [10/16] 0.0, 128
  %1077 = vxpose.xlu0.b32.cont [11/16] 0.0, 128
  %1078 = vxpose.xlu0.b32.cont [12/16] 0.0, 128
  %1079 = vxpose.xlu0.b32.cont [13/16] 0.0, 128
  %1080 = vxpose.xlu0.b32.cont [14/16] 0.0, 128
  %1081 = vxpose.xlu0.b32.cont [15/16] 0.0, 128
  %1082 = vxpose.xlu0.b32.end [16/16] 0.0, 128
  %v1083 = vpop.trf.xlu0
  %v1084 = vpop.trf.xlu0
  %v1085 = vpop.trf.xlu0
  %v1086 = vpop.trf.xlu0
  %v1087 = vpop.trf.xlu0
  %v1088 = vpop.trf.xlu0
  %v1089 = vpop.trf.xlu0
  %v1090 = vpop.trf.xlu0
  %v1091 = vpop.trf.xlu0
  %v1092 = vpop.trf.xlu0
  %v1093 = vpop.trf.xlu0
  %v1094 = vpop.trf.xlu0
  %v1095 = vpop.trf.xlu0
  %v1096 = vpop.trf.xlu0
  %v1097 = vpop.trf.xlu0
  %v1098 = vpop.trf.xlu0
  %v1100 = vsel %vm214, %v1083, 0
  %v1103 = vsel %vm214, %v1084, 0
  %v1106 = vsel %vm214, %v1085, 0
  %v1109 = vsel %vm214, %v1086, 0
  %1111 = vmatprep.subr.mxu0 0.0
  %1112 = vmatpush1.msra.mxu0 0.0
  %1113 = vmatprep.subr.mxu0 0.0
  %1114 = vmatpush1.msra.mxu0 0.0
  %1115 = vmatprep.subr.mxu0 0.0
  %1116 = vmatpush1.msra.mxu0 0.0
  %1117 = vmatprep.subr.mxu0 0.0
  %1118 = vmatpush1.msra.mxu0 0.0
  %1119 = vmatprep.subr.mxu0 0.0
  %1120 = vmatpush1.msra.mxu0 0.0
  %1121 = vmatprep.subr.mxu0 0.0
  %1122 = vmatpush1.msra.mxu0 0.0
  %1123 = vmatprep.subr.mxu0 0.0
  %1124 = vmatpush1.msra.mxu0 0.0
  %1125 = vmatprep.subr.mxu0 0.0
  %1126 = vmatpush1.msra.mxu0 0.0
  %1127 = vmatprep.subr.mxu0 0.0
  %1128 = vmatpush1.msra.mxu0 0.0
  %1129 = vmatprep.subr.mxu0 0.0
  %1130 = vmatpush1.msra.mxu0 0.0
  %1131 = vmatprep.subr.mxu0 0.0
  %1132 = vmatpush1.msra.mxu0 0.0
  %1133 = vmatprep.subr.mxu0 0.0
  %1134 = vmatpush1.msra.mxu0 0.0
  %1135 = vmatprep.subr.mxu0 0.0
  %1136 = vmatpush1.msra.mxu0 0.0
  %1137 = vmatprep.subr.mxu0 0.0
  %1138 = vmatpush1.msra.mxu0 0.0
  %1139 = vmatprep.subr.mxu0 0.0
  %1140 = vmatpush1.msra.mxu0 0.0
  %1141 = vmatprep.subr.mxu0 %v1061
  %1142 = vmatpush1.msra.mxu0 %v1060
  %1143 = vmatprep.subr.mxu0 0.0
  %1144 = vmatpush2.msra.mxu0 0.0
  %1145 = vmatprep.subr.mxu0 0.0
  %1146 = vmatpush2.msra.mxu0 0.0
  %1147 = vmatprep.subr.mxu0 0.0
  %1148 = vmatpush2.msra.mxu0 0.0
  %1149 = vmatprep.subr.mxu0 0.0
  %1150 = vmatpush2.msra.mxu0 0.0
  %1151 = vmatprep.subr.mxu0 0.0
  %1152 = vmatpush2.msra.mxu0 0.0
  %1153 = vmatprep.subr.mxu0 0.0
  %1154 = vmatpush2.msra.mxu0 0.0
  %1155 = vmatprep.subr.mxu0 0.0
  %1156 = vmatpush2.msra.mxu0 0.0
  %1157 = vmatprep.subr.mxu0 0.0
  %1158 = vmatpush2.msra.mxu0 0.0
  %1159 = vmatprep.subr.mxu0 0.0
  %1160 = vmatpush2.msra.mxu0 0.0
  %1161 = vmatprep.subr.mxu0 0.0
  %1162 = vmatpush2.msra.mxu0 0.0
  %1163 = vmatprep.subr.mxu0 0.0
  %1164 = vmatpush2.msra.mxu0 0.0
  %1165 = vmatprep.subr.mxu0 0.0
  %1166 = vmatpush2.msra.mxu0 0.0
  %1167 = vmatprep.subr.mxu0 0.0
  %1168 = vmatpush2.msra.mxu0 0.0
  %1169 = vmatprep.subr.mxu0 0.0
  %1170 = vmatpush2.msra.mxu0 0.0
  %1171 = vmatprep.subr.mxu0 0.0
  %1172 = vmatpush2.msra.mxu0 0.0
  %1173 = vmatprep.subr.mxu0 0.0
  %1174 = vmatpush2.msra.mxu0 0.0
  %1175 = vmatprep.mubr.f32.mxu0 0.0
  %1176 = vmatmul.mubr.f32.gmra.mxu0 %v1100
  %v1177 = vpop.f32.mrf.mxu0
  %v1178 = vadd.f32 0.0, %v1177
  %v1179 = vpop.f32.mrf.mxu0
  %v1180 = vadd.f32 0.0, %v1179
  %1181 = vmatprep.mubr.f32.mxu0 0.0
  %1182 = vmatmul.mubr.f32.gmra.mxu0 %v1103
  %v1183 = vpop.f32.mrf.mxu0
  %v1184 = vadd.f32 0.0, %v1183
  %v1185 = vpop.f32.mrf.mxu0
  %v1186 = vadd.f32 0.0, %v1185
  %1187 = vmatprep.mubr.f32.mxu0 0.0
  %1188 = vmatmul.mubr.f32.gmra.mxu0 %v1106
  %v1189 = vpop.f32.mrf.mxu0
  %v1190 = vadd.f32 0.0, %v1189
  %v1191 = vpop.f32.mrf.mxu0
  %v1192 = vadd.f32 0.0, %v1191
  %1193 = vmatprep.mubr.f32.mxu0 0.0
  %1194 = vmatmul.mubr.f32.gmra.mxu0 %v1109
  %v1195 = vpop.f32.mrf.mxu0
  %v1196 = vadd.f32 0.0, %v1195
  %v1197 = vpop.f32.mrf.mxu0
  %v1198 = vadd.f32 0.0, %v1197
  %1199 = vdwg.mxu0
  %v1200 = vld [vmem:[%s2] sm:$0xff]
  %v1201 = vld [vmem:[%s2 + $0x8] sm:$0xff]
  %v1202 = vld [vmem:[%s2 + $0x10] sm:$0xff]
  %v1203 = vld [vmem:[%s2 + $0x18] sm:$0xff]
  %v1204 = vmul.f32 %v1190, %v1200
  %v1205 = vmul.f32 %v1192, %v1201
  %v1206 = vmul.f32 %v1196, %v1202
  %v1207 = vmul.f32 %v1198, %v1203
  %v1208 = vadd.f32 %v1178, %v1204
  %v1209 = vadd.f32 %v1180, %v1205
  %v1210 = vadd.f32 %v1184, %v1206
  %v1211 = vadd.f32 %v1186, %v1207
  %v1212 = vld [vmem:[%s3 + $0xb8] sm:$0xff]
  %v1213 = vld [vmem:[%s3 + $0xc0] sm:$0xff]
  %v1214 = vld [vmem:[%s3 + $0xc8] sm:$0xff]
  %v1215 = vld [vmem:[%s3 + $0xd0] sm:$0xff]
  %v1216 = vld [vmem:[%s3 + $0xf8] sm:$0xff]
  %v1217 = vld [vmem:[%s3 + $0x100] sm:$0xff]
  %v1218 = vld [vmem:[%s3 + $0x108] sm:$0xff]
  %v1219 = vld [vmem:[%s3 + $0x110] sm:$0xff]
  %1221 = vset.pattern.permute.xlu0 0
  %1222 = vperm.xlu0 %1221, %v1216
  %v1223 = vpop.permute.xlu0 %1222
  %1226 = vset.pattern.permute.xlu0 0
  %1227 = vperm.xlu0 %1226, %v1217
  %v1228 = vpop.permute.xlu0 %1227
  %1231 = vset.pattern.permute.xlu0 0
  %1232 = vperm.xlu0 %1231, %v1218
  %v1233 = vpop.permute.xlu0 %1232
  %1236 = vset.pattern.permute.xlu0 0
  %1237 = vperm.xlu0 %1236, %v1219
  %v1238 = vpop.permute.xlu0 %1237
  %v1241 = vsel %vm21, %v1212, 0
  %v1244 = vsel %vm21, %v1213, 0
  %v1247 = vsel %vm21, %v1214, 0
  %v1250 = vsel %vm21, %v1215, 0
  %1252 = vmatprep.subr.mxu0 0.0
  %1253 = vmatpush1.msra.mxu0 0.0
  %1254 = vmatprep.subr.mxu0 0.0
  %1255 = vmatpush1.msra.mxu0 0.0
  %1256 = vmatprep.subr.mxu0 0.0
  %1257 = vmatpush1.msra.mxu0 0.0
  %1258 = vmatprep.subr.mxu0 0.0
  %1259 = vmatpush1.msra.mxu0 0.0
  %1260 = vmatprep.subr.mxu0 0.0
  %1261 = vmatpush1.msra.mxu0 0.0
  %1262 = vmatprep.subr.mxu0 0.0
  %1263 = vmatpush1.msra.mxu0 0.0
  %1264 = vmatprep.subr.mxu0 0.0
  %1265 = vmatpush1.msra.mxu0 0.0
  %1266 = vmatprep.subr.mxu0 0.0
  %1267 = vmatpush1.msra.mxu0 0.0
  %1268 = vmatprep.subr.mxu0 0.0
  %1269 = vmatpush1.msra.mxu0 0.0
  %1270 = vmatprep.subr.mxu0 0.0
  %1271 = vmatpush1.msra.mxu0 0.0
  %1272 = vmatprep.subr.mxu0 0.0
  %1273 = vmatpush1.msra.mxu0 0.0
  %1274 = vmatprep.subr.mxu0 0.0
  %1275 = vmatpush1.msra.mxu0 0.0
  %1276 = vmatprep.subr.mxu0 0.0
  %1277 = vmatpush1.msra.mxu0 0.0
  %1278 = vmatprep.subr.mxu0 0.0
  %1279 = vmatpush1.msra.mxu0 0.0
  %1280 = vmatprep.subr.mxu0 %v1211
  %1281 = vmatpush1.msra.mxu0 %v1210
  %1282 = vmatprep.subr.mxu0 %v1209
  %1283 = vmatpush1.msra.mxu0 %v1208
  %1284 = vmatprep.subr.mxu0 0.0
  %1285 = vmatpush2.msra.mxu0 0.0
  %1286 = vmatprep.subr.mxu0 0.0
  %1287 = vmatpush2.msra.mxu0 0.0
  %1288 = vmatprep.subr.mxu0 0.0
  %1289 = vmatpush2.msra.mxu0 0.0
  %1290 = vmatprep.subr.mxu0 0.0
  %1291 = vmatpush2.msra.mxu0 0.0
  %1292 = vmatprep.subr.mxu0 0.0
  %1293 = vmatpush2.msra.mxu0 0.0
  %1294 = vmatprep.subr.mxu0 0.0
  %1295 = vmatpush2.msra.mxu0 0.0
  %1296 = vmatprep.subr.mxu0 0.0
  %1297 = vmatpush2.msra.mxu0 0.0
  %1298 = vmatprep.subr.mxu0 0.0
  %1299 = vmatpush2.msra.mxu0 0.0
  %1300 = vmatprep.subr.mxu0 0.0
  %1301 = vmatpush2.msra.mxu0 0.0
  %1302 = vmatprep.subr.mxu0 0.0
  %1303 = vmatpush2.msra.mxu0 0.0
  %1304 = vmatprep.subr.mxu0 0.0
  %1305 = vmatpush2.msra.mxu0 0.0
  %1306 = vmatprep.subr.mxu0 0.0
  %1307 = vmatpush2.msra.mxu0 0.0
  %1308 = vmatprep.subr.mxu0 0.0
  %1309 = vmatpush2.msra.mxu0 0.0
  %1310 = vmatprep.subr.mxu0 0.0
  %1311 = vmatpush2.msra.mxu0 0.0
  %1312 = vmatprep.subr.mxu0 0.0
  %1313 = vmatpush2.msra.mxu0 0.0
  %1314 = vmatprep.subr.mxu0 0.0
  %1315 = vmatpush2.msra.mxu0 0.0
  %1316 = vmatprep.mubr.f32.mxu0 0.0
  %1317 = vmatmul.mubr.f32.gmra.mxu0 %v1241
  %v1318 = vpop.f32.mrf.mxu0
  %v1319 = vadd.f32 %v1223, %v1318
  %v1320 = vpop.f32.mrf.mxu0
  %v1321 = vadd.f32 %v1223, %v1320
  %1322 = vmatprep.mubr.f32.mxu0 0.0
  %1323 = vmatmul.mubr.f32.gmra.mxu0 %v1244
  %v1324 = vpop.f32.mrf.mxu0
  %v1325 = vadd.f32 %v1228, %v1324
  %v1326 = vpop.f32.mrf.mxu0
  %v1327 = vadd.f32 %v1228, %v1326
  %1328 = vmatprep.mubr.f32.mxu0 0.0
  %1329 = vmatmul.mubr.f32.gmra.mxu0 %v1247
  %v1330 = vpop.f32.mrf.mxu0
  %v1331 = vadd.f32 %v1233, %v1330
  %v1332 = vpop.f32.mrf.mxu0
  %v1333 = vadd.f32 %v1233, %v1332
  %1334 = vmatprep.mubr.f32.mxu0 0.0
  %1335 = vmatmul.mubr.f32.gmra.mxu0 %v1250
  %v1336 = vpop.f32.mrf.mxu0
  %v1337 = vadd.f32 %v1238, %v1336
  %v1338 = vpop.f32.mrf.mxu0
  %v1339 = vadd.f32 %v1238, %v1338
  %1340 = vdwg.mxu0
  %v1341 = vmax.f32 %v1319, 0.0
  %v1342 = vmax.f32 %v1321, 0.0
  %v1343 = vmax.f32 %v1325, 0.0
  %v1344 = vmax.f32 %v1327, 0.0
  %v1345 = vmax.f32 %v1331, 0.0
  %v1346 = vmax.f32 %v1333, 0.0
  %v1347 = vmax.f32 %v1337, 0.0
  %v1348 = vmax.f32 %v1339, 0.0
  %v1349 = vld [vmem:[%s3 + $0xd8] sm:$0xff]
  %v1350 = vld [vmem:[%s3 + $0xe0] sm:$0xff]
  %v1351 = vld [vmem:[%s3 + $0x118] sm:$0xff]
  %v1352 = vld [vmem:[%s3 + $0x120] sm:$0xff]
  %1354 = vset.pattern.permute.xlu0 0
  %1355 = vperm.xlu0 %1354, %v1351
  %v1356 = vpop.permute.xlu0 %1355
  %1359 = vset.pattern.permute.xlu0 0
  %1360 = vperm.xlu0 %1359, %v1352
  %v1361 = vpop.permute.xlu0 %1360
  %v1364 = vsel %vm313, %v1349, 0
  %v1367 = vsel %vm313, %v1350, 0
  %1369 = vmatprep.subr.mxu0 0.0
  %1370 = vmatpush1.msra.mxu0 0.0
  %1371 = vmatprep.subr.mxu0 0.0
  %1372 = vmatpush1.msra.mxu0 0.0
  %1373 = vmatprep.subr.mxu0 0.0
  %1374 = vmatpush1.msra.mxu0 0.0
  %1375 = vmatprep.subr.mxu0 0.0
  %1376 = vmatpush1.msra.mxu0 0.0
  %1377 = vmatprep.subr.mxu0 0.0
  %1378 = vmatpush1.msra.mxu0 0.0
  %1379 = vmatprep.subr.mxu0 0.0
  %1380 = vmatpush1.msra.mxu0 0.0
  %1381 = vmatprep.subr.mxu0 0.0
  %1382 = vmatpush1.msra.mxu0 0.0
  %1383 = vmatprep.subr.mxu0 0.0
  %1384 = vmatpush1.msra.mxu0 0.0
  %1385 = vmatprep.subr.mxu0 0.0
  %1386 = vmatpush1.msra.mxu0 0.0
  %1387 = vmatprep.subr.mxu0 0.0
  %1388 = vmatpush1.msra.mxu0 0.0
  %1389 = vmatprep.subr.mxu0 0.0
  %1390 = vmatpush1.msra.mxu0 0.0
  %1391 = vmatprep.subr.mxu0 0.0
  %1392 = vmatpush1.msra.mxu0 0.0
  %1393 = vmatprep.subr.mxu0 %v1348
  %1394 = vmatpush1.msra.mxu0 %v1347
  %1395 = vmatprep.subr.mxu0 %v1346
  %1396 = vmatpush1.msra.mxu0 %v1345
  %1397 = vmatprep.subr.mxu0 %v1344
  %1398 = vmatpush1.msra.mxu0 %v1343
  %1399 = vmatprep.subr.mxu0 %v1342
  %1400 = vmatpush1.msra.mxu0 %v1341
  %1401 = vmatprep.subr.mxu0 0.0
  %1402 = vmatpush2.msra.mxu0 0.0
  %1403 = vmatprep.subr.mxu0 0.0
  %1404 = vmatpush2.msra.mxu0 0.0
  %1405 = vmatprep.subr.mxu0 0.0
  %1406 = vmatpush2.msra.mxu0 0.0
  %1407 = vmatprep.subr.mxu0 0.0
  %1408 = vmatpush2.msra.mxu0 0.0
  %1409 = vmatprep.subr.mxu0 0.0
  %1410 = vmatpush2.msra.mxu0 0.0
  %1411 = vmatprep.subr.mxu0 0.0
  %1412 = vmatpush2.msra.mxu0 0.0
  %1413 = vmatprep.subr.mxu0 0.0
  %1414 = vmatpush2.msra.mxu0 0.0
  %1415 = vmatprep.subr.mxu0 0.0
  %1416 = vmatpush2.msra.mxu0 0.0
  %1417 = vmatprep.subr.mxu0 0.0
  %1418 = vmatpush2.msra.mxu0 0.0
  %1419 = vmatprep.subr.mxu0 0.0
  %1420 = vmatpush2.msra.mxu0 0.0
  %1421 = vmatprep.subr.mxu0 0.0
  %1422 = vmatpush2.msra.mxu0 0.0
  %1423 = vmatprep.subr.mxu0 0.0
  %1424 = vmatpush2.msra.mxu0 0.0
  %1425 = vmatprep.subr.mxu0 0.0
  %1426 = vmatpush2.msra.mxu0 0.0
  %1427 = vmatprep.subr.mxu0 0.0
  %1428 = vmatpush2.msra.mxu0 0.0
  %1429 = vmatprep.subr.mxu0 0.0
  %1430 = vmatpush2.msra.mxu0 0.0
  %1431 = vmatprep.subr.mxu0 0.0
  %1432 = vmatpush2.msra.mxu0 0.0
  %1433 = vmatprep.mubr.f32.mxu0 0.0
  %1434 = vmatmul.mubr.f32.gmra.mxu0 %v1364
  %v1435 = vpop.f32.mrf.mxu0
  %v1436 = vadd.f32 %v1356, %v1435
  %v1437 = vpop.f32.mrf.mxu0
  %v1438 = vadd.f32 %v1356, %v1437
  %1439 = vmatprep.mubr.f32.mxu0 0.0
  %1440 = vmatmul.mubr.f32.gmra.mxu0 %v1367
  %v1441 = vpop.f32.mrf.mxu0
  %v1442 = vadd.f32 %v1361, %v1441
  %v1443 = vpop.f32.mrf.mxu0
  %v1444 = vadd.f32 %v1361, %v1443
  %1445 = vdwg.mxu0
  %v1446 = vmax.f32 %v1436, 0.0
  %v1447 = vmax.f32 %v1438, 0.0
  %v1448 = vmax.f32 %v1442, 0.0
  %v1449 = vmax.f32 %v1444, 0.0
  %v1451 = vsel %vm313, %v1061, 0
  %v1454 = vsel %vm313, %v1447, 0
  %v1457 = vsel %vm313, %v1449, 0
  %1459 = vmatprep.subr.mxu0 0.0
  %1460 = vmatpush1.xpose.msra.mxu0 0.0
  %1461 = vmatprep.subr.mxu0 0.0
  %1462 = vmatpush1.xpose.msra.mxu0 0.0
  %1463 = vmatprep.subr.mxu0 0.0
  %1464 = vmatpush1.xpose.msra.mxu0 0.0
  %1465 = vmatprep.subr.mxu0 0.0
  %1466 = vmatpush1.xpose.msra.mxu0 0.0
  %1467 = vmatprep.subr.mxu0 0.0
  %1468 = vmatpush1.xpose.msra.mxu0 0.0
  %1469 = vmatprep.subr.mxu0 0.0
  %1470 = vmatpush1.xpose.msra.mxu0 0.0
  %1471 = vmatprep.subr.mxu0 0.0
  %1472 = vmatpush1.xpose.msra.mxu0 0.0
  %1473 = vmatprep.subr.mxu0 0.0
  %1474 = vmatpush1.xpose.msra.mxu0 0.0
  %1475 = vmatprep.subr.mxu0 0.0
  %1476 = vmatpush1.xpose.msra.mxu0 0.0
  %1477 = vmatprep.subr.mxu0 0.0
  %1478 = vmatpush1.xpose.msra.mxu0 0.0
  %1479 = vmatprep.subr.mxu0 0.0
  %1480 = vmatpush1.xpose.msra.mxu0 0.0
  %1481 = vmatprep.subr.mxu0 0.0
  %1482 = vmatpush1.xpose.msra.mxu0 0.0
  %1483 = vmatprep.subr.mxu0 0.0
  %1484 = vmatpush1.xpose.msra.mxu0 0.0
  %1485 = vmatprep.subr.mxu0 0.0
  %1486 = vmatpush1.xpose.msra.mxu0 0.0
  %1487 = vmatprep.subr.mxu0 %v1457
  %1488 = vmatpush1.xpose.msra.mxu0 %v1448
  %1489 = vmatprep.subr.mxu0 %v1454
  %1490 = vmatpush1.xpose.msra.mxu0 %v1446
  %1491 = vmatprep.subr.mxu0 0.0
  %1492 = vmatpush2.xpose.msra.mxu0 0.0
  %1493 = vmatprep.subr.mxu0 0.0
  %1494 = vmatpush2.xpose.msra.mxu0 0.0
  %1495 = vmatprep.subr.mxu0 0.0
  %1496 = vmatpush2.xpose.msra.mxu0 0.0
  %1497 = vmatprep.subr.mxu0 0.0
  %1498 = vmatpush2.xpose.msra.mxu0 0.0
  %1499 = vmatprep.subr.mxu0 0.0
  %1500 = vmatpush2.xpose.msra.mxu0 0.0
  %1501 = vmatprep.subr.mxu0 0.0
  %1502 = vmatpush2.xpose.msra.mxu0 0.0
  %1503 = vmatprep.subr.mxu0 0.0
  %1504 = vmatpush2.xpose.msra.mxu0 0.0
  %1505 = vmatprep.subr.mxu0 0.0
  %1506 = vmatpush2.xpose.msra.mxu0 0.0
  %1507 = vmatprep.subr.mxu0 0.0
  %1508 = vmatpush2.xpose.msra.mxu0 0.0
  %1509 = vmatprep.subr.mxu0 0.0
  %1510 = vmatpush2.xpose.msra.mxu0 0.0
  %1511 = vmatprep.subr.mxu0 0.0
  %1512 = vmatpush2.xpose.msra.mxu0 0.0
  %1513 = vmatprep.subr.mxu0 0.0
  %1514 = vmatpush2.xpose.msra.mxu0 0.0
  %1515 = vmatprep.subr.mxu0 0.0
  %1516 = vmatpush2.xpose.msra.mxu0 0.0
  %1517 = vmatprep.subr.mxu0 0.0
  %1518 = vmatpush2.xpose.msra.mxu0 0.0
  %1519 = vmatprep.subr.mxu0 0.0
  %1520 = vmatpush2.xpose.msra.mxu0 0.0
  %1521 = vmatprep.subr.mxu0 0.0
  %1522 = vmatpush2.xpose.msra.mxu0 0.0
  %1523 = vmatprep.mubr.f32.mxu0 %v1451
  %1524 = vmatmul.mubr.f32.gmra.mxu0 %v1060
  %v1525 = vpop.f32.mrf.mxu0
  %v1526 = vadd.f32 0.0, %v1525
  %v1527 = vpop.f32.mrf.mxu0
  %1528 = vdwg.mxu0
  %v1529 = vld [vmem:[%s3 + $0xe8] sm:$0xff]
  %v1530 = vld [vmem:[%s3 + $0xf0] sm:$0xff]
  %v1531 = vld [vmem:[%s3 + $0x128] sm:$0x1]
  %v1532 = vlaneseq
  %v1533 = vshrl.u32 %v1532, 7
  %v1534 = vsub.s32 0, %v1533
  %v1535 = vrot.slane %v1531, %v1534
  %v1537 = vsel %vm21, %v1526, 0
  %1539 = vmatprep.subr.mxu0 0.0
  %1540 = vmatpush1.msra.mxu0 0.0
  %1541 = vmatprep.subr.mxu0 0.0
  %1542 = vmatpush1.msra.mxu0 0.0
  %1543 = vmatprep.subr.mxu0 0.0
  %1544 = vmatpush1.msra.mxu0 0.0
  %1545 = vmatprep.subr.mxu0 0.0
  %1546 = vmatpush1.msra.mxu0 0.0
  %1547 = vmatprep.subr.mxu0 0.0
  %1548 = vmatpush1.msra.mxu0 0.0
  %1549 = vmatprep.subr.mxu0 0.0
  %1550 = vmatpush1.msra.mxu0 0.0
  %1551 = vmatprep.subr.mxu0 0.0
  %1552 = vmatpush1.msra.mxu0 0.0
  %1553 = vmatprep.subr.mxu0 0.0
  %1554 = vmatpush1.msra.mxu0 0.0
  %1555 = vmatprep.subr.mxu0 0.0
  %1556 = vmatpush1.msra.mxu0 0.0
  %1557 = vmatprep.subr.mxu0 0.0
  %1558 = vmatpush1.msra.mxu0 0.0
  %1559 = vmatprep.subr.mxu0 0.0
  %1560 = vmatpush1.msra.mxu0 0.0
  %1561 = vmatprep.subr.mxu0 0.0
  %1562 = vmatpush1.msra.mxu0 0.0
  %1563 = vmatprep.subr.mxu0 0.0
  %1564 = vmatpush1.msra.mxu0 0.0
  %1565 = vmatprep.subr.mxu0 0.0
  %1566 = vmatpush1.msra.mxu0 0.0
  %1567 = vmatprep.subr.mxu0 0.0
  %1568 = vmatpush1.msra.mxu0 %v1530
  %1569 = vmatprep.subr.mxu0 0.0
  %1570 = vmatpush1.msra.mxu0 %v1529
  %1571 = vmatprep.subr.mxu0 0.0
  %1572 = vmatpush2.msra.mxu0 0.0
  %1573 = vmatprep.subr.mxu0 0.0
  %1574 = vmatpush2.msra.mxu0 0.0
  %1575 = vmatprep.subr.mxu0 0.0
  %1576 = vmatpush2.msra.mxu0 0.0
  %1577 = vmatprep.subr.mxu0 0.0
  %1578 = vmatpush2.msra.mxu0 0.0
  %1579 = vmatprep.subr.mxu0 0.0
  %1580 = vmatpush2.msra.mxu0 0.0
  %1581 = vmatprep.subr.mxu0 0.0
  %1582 = vmatpush2.msra.mxu0 0.0
  %1583 = vmatprep.subr.mxu0 0.0
  %1584 = vmatpush2.msra.mxu0 0.0
  %1585 = vmatprep.subr.mxu0 0.0
  %1586 = vmatpush2.msra.mxu0 0.0
  %1587 = vmatprep.subr.mxu0 0.0
  %1588 = vmatpush2.msra.mxu0 0.0
  %1589 = vmatprep.subr.mxu0 0.0
  %1590 = vmatpush2.msra.mxu0 0.0
  %1591 = vmatprep.subr.mxu0 0.0
  %1592 = vmatpush2.msra.mxu0 0.0
  %1593 = vmatprep.subr.mxu0 0.0
  %1594 = vmatpush2.msra.mxu0 0.0
  %1595 = vmatprep.subr.mxu0 0.0
  %1596 = vmatpush2.msra.mxu0 0.0
  %1597 = vmatprep.subr.mxu0 0.0
  %1598 = vmatpush2.msra.mxu0 0.0
  %1599 = vmatprep.subr.mxu0 0.0
  %1600 = vmatpush2.msra.mxu0 0.0
  %1601 = vmatprep.subr.mxu0 0.0
  %1602 = vmatpush2.msra.mxu0 0.0
  %1603 = vmatprep.mubr.f32.mxu0 0.0
  %1604 = vmatmul.mubr.f32.gmra.mxu0 %v1537
  %v1605 = vpop.f32.mrf.mxu0
  %v1606 = vadd.f32 %v1535, %v1605
  %v1607 = vpop.f32.mrf.mxu0
  %1608 = vdwg.mxu0
  %1609 = vst.msk [vmem:[%s4] sm:$0xff] %vm21, %v888
  %1611 = vrot.lane.b32.xlu0 %v1032, 16
  %v1612 = vpop.permute.xlu0 %1611
  %vm1614 = vcmask 261248
  %1615 = vst.msk [vmem:[%s4] sm:$0xff] %vm1614, %v1612
  %1616 = vrot.lane.b32.xlu0 %v1050, 32
  %v1617 = vpop.permute.xlu0 %1616
  %vm1619 = vcmask 392448
  %1620 = vst.msk [vmem:[%s4] sm:$0xff] %vm1619, %v1617
  %1622 = vrot.lane.b32.xlu0 %v1606, 48
  %v1623 = vpop.permute.xlu0 %1622
  %vm1625 = vcmask 400768
  %1626 = vst.msk [vmem:[%s4] sm:$0xff] %vm1625, %v1623
  // Predicated region
  $region18: #{forward.1} parent=0 // pred_check
    _
  $region19: #{forward.1} parent=0 // pred_check_branch
    %1628 = sbr.rel (0) target = $region21
  $region20: #{forward.1} parent=0 // pred_region
    _
  $region21: #{forward.1} parent=0 // pred_fallthru
    _
  // Predicated region
  $region22: #{forward.1} parent=0 // pred_check
    _
  $region23: #{forward.1} parent=0 // pred_check_branch
    %1630 = sbr.rel (0) target = $region25
  $region24: #{forward.1} parent=0 // pred_region
    _
  $region25: #{forward.1} parent=0 // pred_fallthru
    _

</llo_original>
